<compile_context>
chip_gen: v7x
topology: tpu7x:2x2x1
jax: 0.10.0
libtpu: 0.0.40
codegen_flags: <defaults>
</compile_context>

<pallas_src>
import functools

import jax
import jax.numpy as jnp
from jax.experimental import pallas as pl
from jax.experimental.pallas import tpu as pltpu


def _round_up(x, m):
    return ((x + m - 1) // m) * m


# ----------------------------------------------------------------------------
# Pallas kernel: fused 3-layer MLP  (Linear -> ReLU -> Linear -> ReLU -> Linear)
# ----------------------------------------------------------------------------
def mlp3_kernel(x_ref, w1_ref, b1_ref, w2_ref, b2_ref, w3_ref, b3_ref, o_ref):
    # x arrives in its storage dtype (f32); cast to the MXU compute dtype
    # per-tile inside the kernel (no separate HBM pass). Accumulate in f32;
    # bias-add / ReLU epilogue in f32.
    cd = w1_ref.dtype
    x = x_ref[...]
    h = jnp.dot(x.astype(cd), w1_ref[...], preferred_element_type=jnp.float32)
    h = jnp.maximum(h + b1_ref[...], 0.0)
    h = jnp.dot(h.astype(cd), w2_ref[...], preferred_element_type=jnp.float32)
    h = jnp.maximum(h + b2_ref[...], 0.0)
    h = jnp.dot(h.astype(cd), w3_ref[...], preferred_element_type=jnp.float32)
    h = h + b3_ref[...]                                # output activation = Identity
    o_ref[...] = h.astype(o_ref.dtype)


# ----------------------------------------------------------------------------
# Wrapper: tile rows, keep weights resident, handle ragged row counts (no pad)
# ----------------------------------------------------------------------------
@functools.partial(jax.jit, static_argnames=("max_tile_m", "compute_dtype"))
def decode_mlp(node_x, params, *, max_tile_m=2048, compute_dtype=jnp.bfloat16):
    """Apply the Decoder MLP to node_x ([M, nnode_in]) with one fused Pallas call."""
    w1, b1, w2, b2, w3, b3 = params
    M, Din = node_x.shape
    H = w1.shape[1]
    Dout = w3.shape[1]
    out_dtype = node_x.dtype

    # Pick an even number of grid steps (>= 2, so both v7x TCs get work) and
    # derive the row tile from it: padding waste is confined to < 8 rows of the
    # last (ragged) block, which Pallas masks — no materialized padded copy.
    n_steps = pl.cdiv(M, max_tile_m)
    n_steps = max(2, n_steps + (n_steps % 2))
    tm = max(8, _round_up(pl.cdiv(M, n_steps), 8))
    grid = (pl.cdiv(M, tm),)

    # Weights in the MXU compute dtype; biases stay f32 for the epilogue.
    w1c = w1.astype(compute_dtype)
    w2c = w2.astype(compute_dtype)
    w3c = w3.astype(compute_dtype)
    b1r = b1.reshape(1, H).astype(jnp.float32)
    b2r = b2.reshape(1, H).astype(jnp.float32)
    b3r = b3.reshape(1, Dout).astype(jnp.float32)

    def resident(arr):
        # Small weights / biases: full-array block with a constant index_map
        # -> fetched once, VMEM-resident across all grid steps.
        return pl.BlockSpec(arr.shape, lambda i: (0,) * arr.ndim)

    out = pl.pallas_call(
        mlp3_kernel,
        out_shape=jax.ShapeDtypeStruct((M, Dout), out_dtype),
        grid_spec=pltpu.PrefetchScalarGridSpec(
            num_scalar_prefetch=0,
            grid=grid,
            in_specs=[
                pl.BlockSpec((tm, Din), lambda i: (i, 0)),   # activations, row-tiled
                resident(w1c), resident(b1r),
                resident(w2c), resident(b2r),
                resident(w3c), resident(b3r),
            ],
            out_specs=pl.BlockSpec((tm, Dout), lambda i: (i, 0)),
        ),
        compiler_params=pltpu.CompilerParams(
            dimension_semantics=("parallel",)),   # row tiles shard across TCs on v7x
    )(node_x, w1c, b1r, w2c, b2r, w3c, b3r)
    return out


# ----------------------------------------------------------------------------
# Decoder forward (semantics of Decoder.forward; GraphData modeled as a dict)
# ----------------------------------------------------------------------------
def decoder_forward(graph_batch, params):
    out = dict(graph_batch)
    out["decode_output"] = decode_mlp(graph_batch["node_x"], params)
    return out


# ----------------------------------------------------------------------------
# Parameter construction (deterministic, mimics torch nn.Linear default init;
# weights stored [in_features, out_features] so y = x @ W + b)
# ----------------------------------------------------------------------------
def init_decoder_params(key, nnode_in, mlp_hidden_dim, nnode_out, dtype=jnp.float32):
    ks = jax.random.split(key, 6)

    def linear(kw, kb, fan_in, fan_out):
        bound = 1.0 / jnp.sqrt(jnp.float32(fan_in))
        w = jax.random.uniform(kw, (fan_in, fan_out), dtype, -bound, bound)
        b = jax.random.uniform(kb, (fan_out,), dtype, -bound, bound)
        return w, b

    w1, b1 = linear(ks[0], ks[1], nnode_in, mlp_hidden_dim)
    w2, b2 = linear(ks[2], ks[3], mlp_hidden_dim, mlp_hidden_dim)
    w3, b3 = linear(ks[4], ks[5], mlp_hidden_dim, nnode_out)
    return (w1, b1, w2, b2, w3, b3)


def decode_mlp_reference(node_x, params):
    """Pure-JAX f32 reference of build_mlp(nnode_in, [H, H], nnode_out)."""
    w1, b1, w2, b2, w3, b3 = params
    h = jnp.maximum(node_x @ w1 + b1, 0.0)
    h = jnp.maximum(h @ w2 + b2, 0.0)
    return h @ w3 + b3


# ----------------------------------------------------------------------------
# Main
# ----------------------------------------------------------------------------
if __name__ == "__main__":
    # Decoder hyper-params (lane/MXU-friendly).
    nnode_in = 128
    nnode_out = 128
    nmlp_layers = 2          # kernel is specialized for the typical nmlp_layers=2
    mlp_hidden_dim = 128
    N = 1000                 # node count NOT a multiple of the tile -> ragged last block

    key = jax.random.PRNGKey(0)
    k_param, k_x = jax.random.split(key)
    params = init_decoder_params(k_param, nnode_in, mlp_hidden_dim, nnode_out)
    node_x = jax.random.normal(k_x, (N, nnode_in), jnp.float32)

    graph_batch = {"node_x": node_x}
    out_batch = decoder_forward(graph_batch, params)
    decode_output = out_batch["decode_output"]
    jax.block_until_ready(decode_output)

    assert decode_output.shape == (N, nnode_out)
    assert decode_output.dtype == node_x.dtype

    # Loose check vs. f32 reference (kernel matmuls run in bf16 w/ f32 accumulation).
    ref = decode_mlp_reference(node_x, params)
    assert bool(jnp.all(jnp.isfinite(decode_output)))
    assert bool(jnp.allclose(decode_output, ref, rtol=5e-2, atol=5e-2))

    print("KERNEL_OK")
</pallas_src>

<mosaic_0001>
module attributes {stable_mosaic.version = 11 : i64} {
  func.func @mlp3_kernel(%arg0: i32, %arg1: memref<504x128xf32, #tpu.memory_space<vmem>>, %arg2: memref<128x128xbf16, #tpu.memory_space<vmem>>, %arg3: memref<1x128xf32, #tpu.memory_space<vmem>>, %arg4: memref<128x128xbf16, #tpu.memory_space<vmem>>, %arg5: memref<1x128xf32, #tpu.memory_space<vmem>>, %arg6: memref<128x128xbf16, #tpu.memory_space<vmem>>, %arg7: memref<1x128xf32, #tpu.memory_space<vmem>>, %arg8: memref<504x128xf32, #tpu.memory_space<vmem>>) attributes {dimension_semantics = [#tpu.dimension_semantics<parallel>], iteration_bounds = array<i64: 2>, scalar_prefetch = 0 : i64, scratch_operands = 0 : i64, tpu.core_type = #tpu.core_type<tc>, window_params = [{transform_indices = @transform_0, window_bounds = array<i64: 504, 128>}, {pipeline_mode = #tpu.pipeline_mode<synchronous>, transform_indices = @transform_1, window_bounds = array<i64: 128, 128>}, {pipeline_mode = #tpu.pipeline_mode<synchronous>, transform_indices = @transform_2, window_bounds = array<i64: 1, 128>}, {pipeline_mode = #tpu.pipeline_mode<synchronous>, transform_indices = @transform_3, window_bounds = array<i64: 128, 128>}, {pipeline_mode = #tpu.pipeline_mode<synchronous>, transform_indices = @transform_4, window_bounds = array<i64: 1, 128>}, {pipeline_mode = #tpu.pipeline_mode<synchronous>, transform_indices = @transform_5, window_bounds = array<i64: 128, 128>}, {pipeline_mode = #tpu.pipeline_mode<synchronous>, transform_indices = @transform_6, window_bounds = array<i64: 1, 128>}, {transform_indices = @transform_7, window_bounds = array<i64: 504, 128>}]} {
    %c0 = arith.constant 0 : index
    %c0_0 = arith.constant 0 : index
    %0 = vector.load %arg1[%c0, %c0_0] : memref<504x128xf32, #tpu.memory_space<vmem>>, vector<504x128xf32>
    %1 = arith.truncf %0 : vector<504x128xf32> to vector<504x128xbf16>
    %c0_1 = arith.constant 0 : index
    %c0_2 = arith.constant 0 : index
    %2 = vector.load %arg2[%c0_1, %c0_2] : memref<128x128xbf16, #tpu.memory_space<vmem>>, vector<128x128xbf16>
    %cst = arith.constant dense<0.000000e+00> : vector<504x128xf32>
    %3 = tpu.matmul %1, %2, %cst {dimension_numbers = #tpu.dot_dimension_numbers<[1], [0], [0], [1], [0, 0, 1, 1], [], []>} : vector<504x128xbf16>, vector<128x128xbf16>, vector<504x128xf32> -> vector<504x128xf32>
    %c0_3 = arith.constant 0 : index
    %c0_4 = arith.constant 0 : index
    %4 = vector.load %arg3[%c0_3, %c0_4] : memref<1x128xf32, #tpu.memory_space<vmem>>, vector<1x128xf32>
    %5 = vector.broadcast %4 : vector<1x128xf32> to vector<504x128xf32>
    %6 = arith.addf %3, %5 : vector<504x128xf32>
    %cst_5 = arith.constant 0.000000e+00 : f32
    %7 = vector.broadcast %cst_5 : f32 to vector<504x128xf32>
    %8 = arith.maximumf %6, %7 : vector<504x128xf32>
    %9 = arith.truncf %8 : vector<504x128xf32> to vector<504x128xbf16>
    %c0_6 = arith.constant 0 : index
    %c0_7 = arith.constant 0 : index
    %10 = vector.load %arg4[%c0_6, %c0_7] : memref<128x128xbf16, #tpu.memory_space<vmem>>, vector<128x128xbf16>
    %cst_8 = arith.constant dense<0.000000e+00> : vector<504x128xf32>
    %11 = tpu.matmul %9, %10, %cst_8 {dimension_numbers = #tpu.dot_dimension_numbers<[1], [0], [0], [1], [0, 0, 1, 1], [], []>} : vector<504x128xbf16>, vector<128x128xbf16>, vector<504x128xf32> -> vector<504x128xf32>
    %c0_9 = arith.constant 0 : index
    %c0_10 = arith.constant 0 : index
    %12 = vector.load %arg5[%c0_9, %c0_10] : memref<1x128xf32, #tpu.memory_space<vmem>>, vector<1x128xf32>
    %13 = vector.broadcast %12 : vector<1x128xf32> to vector<504x128xf32>
    %14 = arith.addf %11, %13 : vector<504x128xf32>
    %cst_11 = arith.constant 0.000000e+00 : f32
    %15 = vector.broadcast %cst_11 : f32 to vector<504x128xf32>
    %16 = arith.maximumf %14, %15 : vector<504x128xf32>
    %17 = arith.truncf %16 : vector<504x128xf32> to vector<504x128xbf16>
    %c0_12 = arith.constant 0 : index
    %c0_13 = arith.constant 0 : index
    %18 = vector.load %arg6[%c0_12, %c0_13] : memref<128x128xbf16, #tpu.memory_space<vmem>>, vector<128x128xbf16>
    %cst_14 = arith.constant dense<0.000000e+00> : vector<504x128xf32>
    %19 = tpu.matmul %17, %18, %cst_14 {dimension_numbers = #tpu.dot_dimension_numbers<[1], [0], [0], [1], [0, 0, 1, 1], [], []>} : vector<504x128xbf16>, vector<128x128xbf16>, vector<504x128xf32> -> vector<504x128xf32>
    %c0_15 = arith.constant 0 : index
    %c0_16 = arith.constant 0 : index
    %20 = vector.load %arg7[%c0_15, %c0_16] : memref<1x128xf32, #tpu.memory_space<vmem>>, vector<1x128xf32>
    %21 = vector.broadcast %20 : vector<1x128xf32> to vector<504x128xf32>
    %22 = arith.addf %19, %21 : vector<504x128xf32>
    %c0_17 = arith.constant 0 : index
    %c0_18 = arith.constant 0 : index
    %23 = vector.load %arg8[%c0_17, %c0_18] : memref<504x128xf32, #tpu.memory_space<vmem>>, vector<504x128xf32>
    tpu.vector_store %arg8[%c0_17, %c0_18], %22 {strides = array<i32>} : memref<504x128xf32, #tpu.memory_space<vmem>>, vector<504x128xf32>,
    return
  }
  func.func @transform_0(%arg0: i32) -> (i32, i32) {
    %c0_i32 = arith.constant 0 : i32
    %c0_i32_0 = arith.constant 0 : i32
    return %arg0, %c0_i32 : i32, i32
  }
  func.func @transform_1(%arg0: i32) -> (i32, i32) {
    %c0_i32 = arith.constant 0 : i32
    %c0_i32_0 = arith.constant 0 : i32
    %c0_i32_1 = arith.constant 0 : i32
    return %c0_i32, %c0_i32_0 : i32, i32
  }
  func.func @transform_2(%arg0: i32) -> (i32, i32) {
    %c0_i32 = arith.constant 0 : i32
    %c0_i32_0 = arith.constant 0 : i32
    %c0_i32_1 = arith.constant 0 : i32
    return %c0_i32, %c0_i32_0 : i32, i32
  }
  func.func @transform_3(%arg0: i32) -> (i32, i32) {
    %c0_i32 = arith.constant 0 : i32
    %c0_i32_0 = arith.constant 0 : i32
    %c0_i32_1 = arith.constant 0 : i32
    return %c0_i32, %c0_i32_0 : i32, i32
  }
  func.func @transform_4(%arg0: i32) -> (i32, i32) {
    %c0_i32 = arith.constant 0 : i32
    %c0_i32_0 = arith.constant 0 : i32
    %c0_i32_1 = arith.constant 0 : i32
    return %c0_i32, %c0_i32_0 : i32, i32
  }
  func.func @transform_5(%arg0: i32) -> (i32, i32) {
    %c0_i32 = arith.constant 0 : i32
    %c0_i32_0 = arith.constant 0 : i32
    %c0_i32_1 = arith.constant 0 : i32
    return %c0_i32, %c0_i32_0 : i32, i32
  }
  func.func @transform_6(%arg0: i32) -> (i32, i32) {
    %c0_i32 = arith.constant 0 : i32
    %c0_i32_0 = arith.constant 0 : i32
    %c0_i32_1 = arith.constant 0 : i32
    return %c0_i32, %c0_i32_0 : i32, i32
  }
  func.func @transform_7(%arg0: i32) -> (i32, i32) {
    %c0_i32 = arith.constant 0 : i32
    %c0_i32_0 = arith.constant 0 : i32
    return %arg0, %c0_i32 : i32, i32
  }
}

</mosaic_0001>

<llo_original>
// kernel: decode_mlp.1
$region0: #{decode_mlp.1}
  #allocation0 [shape = 'u32[]', space=smem, size = 0x4, offset = 0x4, fixed_abs, tag = 'smem constant byte address 0x4 - core index']
  #allocation1 [shape = 'u32[144,128]{1,0:T(1,128)}', space=vmem, size = 0x12000, scoped, tag = 'internal scratch']
  %s0 = inlined_call_operand.hbm [shape: f32[1000,128], index: 0, kind: input, shape index: {}]
  %s1 = inlined_call_operand.vmem [shape: bf16[128,128], index: 1, kind: input, shape index: {}]
  %s2 = inlined_call_operand.vmem [shape: f32[1,128], index: 2, kind: input, shape index: {}]
  %s3 = inlined_call_operand.vmem [shape: bf16[128,128], index: 3, kind: input, shape index: {}]
  %s4 = inlined_call_operand.vmem [shape: f32[1,128], index: 4, kind: input, shape index: {}]
  %s5 = inlined_call_operand.vmem [shape: bf16[128,128], index: 5, kind: input, shape index: {}]
  %s6 = inlined_call_operand.vmem [shape: f32[1,128], index: 6, kind: input, shape index: {}]
  %s7 = inlined_call_operand.hbm [shape: f32[1000,128], index: 7, kind: output, shape index: {}]
  %s8 = sld [smem:[#allocation0]]
  $region65: #{decode_mlp.1} parent=0
    _
  %s10 = ssub.s32 1, %s8
  %s11 = scalar_select 0, %s10, %s8
  $region1: #{decode_mlp.1} parent=0
    #allocation2 [shape = 'u8[516096]{0}', space=vmem, size = 0x7e000, scoped, tag = 'input window, operand 0']
    #allocation3 [shape = 's32[2]{0}', space=sflag, size = 0x8, scoped, tag = 'scoped memory for decode_mlp.1']
    #allocation4 [shape = 's32[2]{0}', space=sflag, size = 0x8, scoped, tag = 'scoped memory for decode_mlp.1']
    #allocation5 [shape = 'u8[516096]{0}', space=vmem, size = 0x7e000, scoped, tag = 'output window, operand 0']
    %12 = vsyncpa [#allocation3], 0
    %s13 = scalar_lea.sflag [#allocation3], 1
    %14 = vsyncpa %s13, 0
    %15 = vsyncpa [#allocation4], 0
    %s16 = scalar_lea.sflag [#allocation4], 1
    %17 = vsyncpa %s16, 0
    loop: start=0, step=1, limit=4
    $region2: #{decode_mlp.1} parent=1 // loop_pre_header
      _
    $region3: #{decode_mlp.1} parent=1 // loop_header
      %s19 = sphi 0, %s23
      %p20 = scmp.ge.s32.totalorder %s19, 4
      %s29 = sphi 0, %s31
      %s32 = sphi 0, %s29
      %s33 = sphi 0, %s32
      %s49 = sphi 0, %s33
      %s53 = sphi 0, %s53
      %s55 = sphi 0, %s53
      %s56 = sphi 0, %s55
      %s70 = sphi 0, %s56
      %s74 = sphi 0, %s74
      %s76 = sphi 0, %s74
      %s77 = sphi 0, %s76
      %s91 = sphi 0, %s77
      %s95 = sphi 0, %s95
      %s97 = sphi 0, %s95
      %s98 = sphi 0, %s97
      %s112 = sphi 0, %s98
      %s116 = sphi 0, %s116
      %s118 = sphi 0, %s116
      %s119 = sphi 0, %s118
      %s133 = sphi 0, %s119
      %s137 = sphi 0, %s137
      %s139 = sphi 0, %s137
      %s140 = sphi 0, %s139
      %s154 = sphi 0, %s140
      %s158 = sphi 0, %s158
      %s160 = sphi 0, %s158
      %s161 = sphi 0, %s160
      %s175 = sphi 0, %s161
      %s181 = sphi 0, %s183
      %s184 = sphi 0, %s181
      %s185 = sphi 0, %s184
      %s201 = sphi 0, %s185
    $region4: #{decode_mlp.1} parent=1 // loop_header_branch
      %22 = sbr.rel (%p20) target = $region8
    $region5: #{decode_mlp.1} parent=1 // loop_body
      %s24 = ssub.s32 %s19, 1
      %s25 = ssub.s32 %s19, 2
      %s26 = sadd.s32 %s19, 1
      %s27 = ssub.s32 %s19, %s26
      %p28 = scmp.eq.s32.totalorder %s27, 0
      %s30 = sadd.s32 %s29, 1
      %s31 = scalar_select %p28, %s29, %s30
      %p34 = pneg %p28
      %p35 = scmp.eq.s32.totalorder %s19, 1
      %p36 = por %p34, %p35
      %p37 = scmp.ne.s32.totalorder %s29, %s32
      %p38 = scmp.eq.s32.totalorder %s19, 0
      %p39 = por %p37, %p38
      %p40 = scmp.ne.s32.totalorder %s29, %s32
      %p41 = scmp.eq.s32.totalorder %s24, 1
      %p42 = por %p40, %p41
      %p43 = scmp.ne.s32.totalorder %s32, %s33
      %p44 = scmp.eq.s32.totalorder %s24, 0
      %p45 = por %p43, %p44
      %p46 = scmp.ne.s32.totalorder %s32, %s33
      %p47 = scmp.eq.s32.totalorder %s25, 1
      %p48 = por %p46, %p47
      %p50 = scmp.ne.s32.totalorder %s33, %s49
      %p51 = scmp.eq.s32.totalorder %s25, 0
      %p52 = por %p50, %p51
      %s54 = sadd.s32 %s53, 1
      %p57 = scmp.eq.s32.totalorder %s19, 1
      %p58 = scmp.ne.s32.totalorder %s53, %s55
      %p59 = scmp.eq.s32.totalorder %s19, 0
      %p60 = por %p58, %p59
      %p61 = scmp.ne.s32.totalorder %s53, %s55
      %p62 = scmp.eq.s32.totalorder %s24, 1
      %p63 = por %p61, %p62
      %p64 = scmp.ne.s32.totalorder %s55, %s56
      %p65 = scmp.eq.s32.totalorder %s24, 0
      %p66 = por %p64, %p65
      %p67 = scmp.ne.s32.totalorder %s55, %s56
      %p68 = scmp.eq.s32.totalorder %s25, 1
      %p69 = por %p67, %p68
      %p71 = scmp.ne.s32.totalorder %s56, %s70
      %p72 = scmp.eq.s32.totalorder %s25, 0
      %p73 = por %p71, %p72
      %s75 = sadd.s32 %s74, 1
      %p78 = scmp.eq.s32.totalorder %s19, 1
      %p79 = scmp.ne.s32.totalorder %s74, %s76
      %p80 = scmp.eq.s32.totalorder %s19, 0
      %p81 = por %p79, %p80
      %p82 = scmp.ne.s32.totalorder %s74, %s76
      %p83 = scmp.eq.s32.totalorder %s24, 1
      %p84 = por %p82, %p83
      %p85 = scmp.ne.s32.totalorder %s76, %s77
      %p86 = scmp.eq.s32.totalorder %s24, 0
      %p87 = por %p85, %p86
      %p88 = scmp.ne.s32.totalorder %s76, %s77
      %p89 = scmp.eq.s32.totalorder %s25, 1
      %p90 = por %p88, %p89
      %p92 = scmp.ne.s32.totalorder %s77, %s91
      %p93 = scmp.eq.s32.totalorder %s25, 0
      %p94 = por %p92, %p93
      %s96 = sadd.s32 %s95, 1
      %p99 = scmp.eq.s32.totalorder %s19, 1
      %p100 = scmp.ne.s32.totalorder %s95, %s97
      %p101 = scmp.eq.s32.totalorder %s19, 0
      %p102 = por %p100, %p101
      %p103 = scmp.ne.s32.totalorder %s95, %s97
      %p104 = scmp.eq.s32.totalorder %s24, 1
      %p105 = por %p103, %p104
      %p106 = scmp.ne.s32.totalorder %s97, %s98
      %p107 = scmp.eq.s32.totalorder %s24, 0
      %p108 = por %p106, %p107
      %p109 = scmp.ne.s32.totalorder %s97, %s98
      %p110 = scmp.eq.s32.totalorder %s25, 1
      %p111 = por %p109, %p110
      %p113 = scmp.ne.s32.totalorder %s98, %s112
      %p114 = scmp.eq.s32.totalorder %s25, 0
      %p115 = por %p113, %p114
      %s117 = sadd.s32 %s116, 1
      %p120 = scmp.eq.s32.totalorder %s19, 1
      %p121 = scmp.ne.s32.totalorder %s116, %s118
      %p122 = scmp.eq.s32.totalorder %s19, 0
      %p123 = por %p121, %p122
      %p124 = scmp.ne.s32.totalorder %s116, %s118
      %p125 = scmp.eq.s32.totalorder %s24, 1
      %p126 = por %p124, %p125
      %p127 = scmp.ne.s32.totalorder %s118, %s119
      %p128 = scmp.eq.s32.totalorder %s24, 0
      %p129 = por %p127, %p128
      %p130 = scmp.ne.s32.totalorder %s118, %s119
      %p131 = scmp.eq.s32.totalorder %s25, 1
      %p132 = por %p130, %p131
      %p134 = scmp.ne.s32.totalorder %s119, %s133
      %p135 = scmp.eq.s32.totalorder %s25, 0
      %p136 = por %p134, %p135
      %s138 = sadd.s32 %s137, 1
      %p141 = scmp.eq.s32.totalorder %s19, 1
      %p142 = scmp.ne.s32.totalorder %s137, %s139
      %p143 = scmp.eq.s32.totalorder %s19, 0
      %p144 = por %p142, %p143
      %p145 = scmp.ne.s32.totalorder %s137, %s139
      %p146 = scmp.eq.s32.totalorder %s24, 1
      %p147 = por %p145, %p146
      %p148 = scmp.ne.s32.totalorder %s139, %s140
      %p149 = scmp.eq.s32.totalorder %s24, 0
      %p150 = por %p148, %p149
      %p151 = scmp.ne.s32.totalorder %s139, %s140
      %p152 = scmp.eq.s32.totalorder %s25, 1
      %p153 = por %p151, %p152
      %p155 = scmp.ne.s32.totalorder %s140, %s154
      %p156 = scmp.eq.s32.totalorder %s25, 0
      %p157 = por %p155, %p156
      %s159 = sadd.s32 %s158, 1
      %p162 = scmp.eq.s32.totalorder %s19, 1
      %p163 = scmp.ne.s32.totalorder %s158, %s160
      %p164 = scmp.eq.s32.totalorder %s19, 0
      %p165 = por %p163, %p164
      %p166 = scmp.ne.s32.totalorder %s158, %s160
      %p167 = scmp.eq.s32.totalorder %s24, 1
      %p168 = por %p166, %p167
      %p169 = scmp.ne.s32.totalorder %s160, %s161
      %p170 = scmp.eq.s32.totalorder %s24, 0
      %p171 = por %p169, %p170
      %p172 = scmp.ne.s32.totalorder %s160, %s161
      %p173 = scmp.eq.s32.totalorder %s25, 1
      %p174 = por %p172, %p173
      %p176 = scmp.ne.s32.totalorder %s161, %s175
      %p177 = scmp.eq.s32.totalorder %s25, 0
      %p178 = por %p176, %p177
      %s179 = ssub.s32 %s19, %s26
      %p180 = scmp.eq.s32.totalorder %s179, 0
      %s182 = sadd.s32 %s181, 1
      %s183 = scalar_select %p180, %s181, %s182
      %p186 = pneg %p180
      %p187 = scmp.eq.s32.totalorder %s19, 1
      %p188 = por %p186, %p187
      %p189 = scmp.ne.s32.totalorder %s181, %s184
      %p190 = scmp.eq.s32.totalorder %s19, 0
      %p191 = por %p189, %p190
      %p192 = scmp.ne.s32.totalorder %s181, %s184
      %p193 = scmp.eq.s32.totalorder %s24, 1
      %p194 = por %p192, %p193
      %p195 = scmp.ne.s32.totalorder %s184, %s185
      %p196 = scmp.eq.s32.totalorder %s24, 0
      %p197 = por %p195, %p196
      %p198 = scmp.ne.s32.totalorder %s184, %s185
      %p199 = scmp.eq.s32.totalorder %s25, 1
      %p200 = por %p198, %p199
      %p202 = scmp.ne.s32.totalorder %s185, %s201
      %p203 = scmp.eq.s32.totalorder %s25, 0
      %p204 = por %p202, %p203
      %p205 = scmp.le.s32.totalorder 1, %s19
      %p206 = scmp.lt.s32.totalorder %s19, 3
      %p207 = pnand %p205, %p206
      %p208 = pneg %p207
      // Predicated region
      $region9: #{decode_mlp.1} parent=5 // pred_check
        _
      $region10: #{decode_mlp.1} parent=5 // pred_check_branch
        %210 = sbr.rel (%p207) target = $region12
      $region11: #{decode_mlp.1} parent=5 // pred_region
        %s211 = ssub.s32 %s19, 1
        // Predicated region
        $region13: #{decode_mlp.1} parent=11 // pred_check
          %p212 = pneg %p66
        $region14: #{decode_mlp.1} parent=11 // pred_check_branch
          %214 = sbr.rel (%p212) target = $region16
        $region15: #{decode_mlp.1} parent=11 // pred_region
          _
        $region16: #{decode_mlp.1} parent=11 // pred_fallthru
          _
        // Predicated region
        $region17: #{decode_mlp.1} parent=11 // pred_check
          %p215 = pneg %p87
        $region18: #{decode_mlp.1} parent=11 // pred_check_branch
          %217 = sbr.rel (%p215) target = $region20
        $region19: #{decode_mlp.1} parent=11 // pred_region
          _
        $region20: #{decode_mlp.1} parent=11 // pred_fallthru
          _
        // Predicated region
        $region21: #{decode_mlp.1} parent=11 // pred_check
          %p218 = pneg %p108
        $region22: #{decode_mlp.1} parent=11 // pred_check_branch
          %220 = sbr.rel (%p218) target = $region24
        $region23: #{decode_mlp.1} parent=11 // pred_region
          _
        $region24: #{decode_mlp.1} parent=11 // pred_fallthru
          _
        // Predicated region
        $region25: #{decode_mlp.1} parent=11 // pred_check
          %p221 = pneg %p129
        $region26: #{decode_mlp.1} parent=11 // pred_check_branch
          %223 = sbr.rel (%p221) target = $region28
        $region27: #{decode_mlp.1} parent=11 // pred_region
          _
        $region28: #{decode_mlp.1} parent=11 // pred_fallthru
          _
        // Predicated region
        $region29: #{decode_mlp.1} parent=11 // pred_check
          %p224 = pneg %p150
        $region30: #{decode_mlp.1} parent=11 // pred_check_branch
          %226 = sbr.rel (%p224) target = $region32
        $region31: #{decode_mlp.1} parent=11 // pred_region
          _
        $region32: #{decode_mlp.1} parent=11 // pred_fallthru
          _
        // Predicated region
        $region33: #{decode_mlp.1} parent=11 // pred_check
          %p227 = pneg %p171
        $region34: #{decode_mlp.1} parent=11 // pred_check_branch
          %229 = sbr.rel (%p227) target = $region36
        $region35: #{decode_mlp.1} parent=11 // pred_region
          _
        $region36: #{decode_mlp.1} parent=11 // pred_fallthru
          _
      $region12: #{decode_mlp.1} parent=5 // pred_fallthru
        _
      %p230 = scmp.lt.s32.totalorder %s19, 2
      // Predicated region
      $region37: #{decode_mlp.1} parent=5 // pred_check
        %p231 = pneg %p230
      $region38: #{decode_mlp.1} parent=5 // pred_check_branch
        %233 = sbr.rel (%p231) target = $region40
      $region39: #{decode_mlp.1} parent=5 // pred_region
        // Predicated region
        $region41: #{decode_mlp.1} parent=39 // pred_check
          %p234 = pneg %p39
        $region42: #{decode_mlp.1} parent=39 // pred_check_branch
          %236 = sbr.rel (%p234) target = $region44
        $region43: #{decode_mlp.1} parent=39 // pred_region
          %s237 = sand.u32 %s29, 1
          %s238 = scalar_lea.sflag [#allocation3], %s237
          %s239 = sand.u32 %s29, 1
          %s240 = smul.addr %s239, 504
          %s241 = scalar_lea.vmem [#allocation2], %s240
          %s242 = smul.u32 63, %s19
          %s243 = ssub.s32 125, %s242
          %p244 = scmp.lt.s32.totalorder %s243, 63
          %s245 = scalar_select %p244, %s243, 63
          %s246 = smul.u32 128, %s245
          %s248 = ssub.s32 8064, %s246
          %249 = vsyncadd %s238, %s248
          %p250 = scmp.ne.s32.totalorder 0, %s246
          %s251 = smul.addr %s242, 128
          %s252 = scalar_lea.hbm %s0, %s251
          %s253 = smul.u32 8, %s245
          %s254 = sshll.u32 %s241, 4
          %s255 = int_to_ptr.vmem [resolvable:$true] %s254
          %s256 = sshll.u32 %s253, 4
          %260 = dma.hbm_to_vmem [thread:$0]  (%p250), %s252, %s256, %s255, %s238, 128, 128, 8
        $region44: #{decode_mlp.1} parent=39 // pred_fallthru
          _
      $region40: #{decode_mlp.1} parent=5 // pred_fallthru
        _
      %p261 = scmp.le.s32.totalorder 1, %s19
      %p262 = scmp.lt.s32.totalorder %s19, 3
      %p263 = pnand %p261, %p262
      %p264 = pneg %p263
      // Predicated region
      $region45: #{decode_mlp.1} parent=5 // pred_check
        _
      $region46: #{decode_mlp.1} parent=5 // pred_check_branch
        %266 = sbr.rel (%p263) target = $region48
      $region47: #{decode_mlp.1} parent=5 // pred_region
        %s267 = ssub.s32 %s19, 1
        %s268 = sand.u32 %s32, 1
        %s269 = scalar_lea.sflag [#allocation3], %s268
        %s270 = sand.u32 %s32, 1
        %s271 = smul.addr %s270, 504
        %s272 = scalar_lea.vmem [#allocation2], %s271
        // Predicated region
        $region49: #{decode_mlp.1} parent=47 // pred_check
          %p273 = pneg %p45
        $region50: #{decode_mlp.1} parent=47 // pred_check_branch
          %275 = sbr.rel (%p273) target = $region52
        $region51: #{decode_mlp.1} parent=47 // pred_region
          %276 = dma.done %s269, 8064
        $region52: #{decode_mlp.1} parent=47 // pred_fallthru
          _
        %s277 = sand.u32 %s32, 1
        %s278 = scalar_lea.sflag [#allocation3], %s277
        %s279 = sand.u32 %s32, 1
        %s280 = smul.addr %s279, 504
        %s281 = scalar_lea.vmem [#allocation2], %s280
        %p282 = pneg %p45
        %p283 = pneg %p42
        %p284 = pneg %p66
        %p285 = pneg %p63
        %p286 = pneg %p87
        %p287 = pneg %p84
        %p288 = pneg %p108
        %p289 = pneg %p105
        %p290 = pneg %p129
        %p291 = pneg %p126
        %p292 = pneg %p150
        %p293 = pneg %p147
        %p294 = pneg %p171
        %p295 = pneg %p168
        %p296 = pneg %p197
        %p297 = pneg %p194
        %s298 = sand.u32 %s184, 1
        %s299 = scalar_lea.sflag [#allocation4], %s298
        %s300 = sand.u32 %s184, 1
        %s301 = smul.addr %s300, 504
        %s302 = scalar_lea.vmem [#allocation5], %s301
        %s303 = smul.u32 63, %s24
        %s304 = ssub.s32 125, %s303
        %p305 = scmp.lt.s32.totalorder %s304, 63
        %s306 = scalar_select %p305, %s304, 63
        %s307 = smul.u32 128, %s306
        %s308 = smul.u32 63, %s24
        %s309 = ssub.s32 125, %s308
        %p310 = scmp.lt.s32.totalorder %s309, 63
        %s311 = scalar_select %p310, %s309, 63
        %s312 = smul.u32 128, %s311
        %v314 = vld [vmem:[%s272] sm:$0xff]
        %v315 = vld [vmem:[%s272 + $0x8] sm:$0xff]
        %v316 = vld [vmem:[%s272 + $0x10] sm:$0xff]
        %v317 = vld [vmem:[%s272 + $0x18] sm:$0xff]
        %v318 = vld [vmem:[%s272 + $0x20] sm:$0xff]
        %v319 = vld [vmem:[%s272 + $0x28] sm:$0xff]
        %v320 = vld [vmem:[%s272 + $0x30] sm:$0xff]
        %v321 = vld [vmem:[%s272 + $0x38] sm:$0xff]
        %v322 = vld [vmem:[%s272 + $0x40] sm:$0xff]
        %v323 = vld [vmem:[%s272 + $0x48] sm:$0xff]
        %v324 = vld [vmem:[%s272 + $0x50] sm:$0xff]
        %v325 = vld [vmem:[%s272 + $0x58] sm:$0xff]
        %v326 = vld [vmem:[%s272 + $0x60] sm:$0xff]
        %v327 = vld [vmem:[%s272 + $0x68] sm:$0xff]
        %v328 = vld [vmem:[%s272 + $0x70] sm:$0xff]
        %v329 = vld [vmem:[%s272 + $0x78] sm:$0xff]
        %v330 = vld [vmem:[%s272 + $0x80] sm:$0xff]
        %v331 = vld [vmem:[%s272 + $0x88] sm:$0xff]
        %v332 = vld [vmem:[%s272 + $0x90] sm:$0xff]
        %v333 = vld [vmem:[%s272 + $0x98] sm:$0xff]
        %v334 = vld [vmem:[%s272 + $0xa0] sm:$0xff]
        %v335 = vld [vmem:[%s272 + $0xa8] sm:$0xff]
        %v336 = vld [vmem:[%s272 + $0xb0] sm:$0xff]
        %v337 = vld [vmem:[%s272 + $0xb8] sm:$0xff]
        %v338 = vld [vmem:[%s272 + $0xc0] sm:$0xff]
        %v339 = vld [vmem:[%s272 + $0xc8] sm:$0xff]
        %v340 = vld [vmem:[%s272 + $0xd0] sm:$0xff]
        %v341 = vld [vmem:[%s272 + $0xd8] sm:$0xff]
        %v342 = vld [vmem:[%s272 + $0xe0] sm:$0xff]
        %v343 = vld [vmem:[%s272 + $0xe8] sm:$0xff]
        %v344 = vld [vmem:[%s272 + $0xf0] sm:$0xff]
        %v345 = vld [vmem:[%s272 + $0xf8] sm:$0xff]
        %v346 = vld [vmem:[%s272 + $0x100] sm:$0xff]
        %v347 = vld [vmem:[%s272 + $0x108] sm:$0xff]
        %v348 = vld [vmem:[%s272 + $0x110] sm:$0xff]
        %v349 = vld [vmem:[%s272 + $0x118] sm:$0xff]
        %v350 = vld [vmem:[%s272 + $0x120] sm:$0xff]
        %v351 = vld [vmem:[%s272 + $0x128] sm:$0xff]
        %v352 = vld [vmem:[%s272 + $0x130] sm:$0xff]
        %v353 = vld [vmem:[%s272 + $0x138] sm:$0xff]
        %v354 = vld [vmem:[%s272 + $0x140] sm:$0xff]
        %v355 = vld [vmem:[%s272 + $0x148] sm:$0xff]
        %v356 = vld [vmem:[%s272 + $0x150] sm:$0xff]
        %v357 = vld [vmem:[%s272 + $0x158] sm:$0xff]
        %v358 = vld [vmem:[%s272 + $0x160] sm:$0xff]
        %v359 = vld [vmem:[%s272 + $0x168] sm:$0xff]
        %v360 = vld [vmem:[%s272 + $0x170] sm:$0xff]
        %v361 = vld [vmem:[%s272 + $0x178] sm:$0xff]
        %v362 = vld [vmem:[%s272 + $0x180] sm:$0xff]
        %v363 = vld [vmem:[%s272 + $0x188] sm:$0xff]
        %v364 = vld [vmem:[%s272 + $0x190] sm:$0xff]
        %v365 = vld [vmem:[%s272 + $0x198] sm:$0xff]
        %v366 = vld [vmem:[%s272 + $0x1a0] sm:$0xff]
        %v367 = vld [vmem:[%s272 + $0x1a8] sm:$0xff]
        %v368 = vld [vmem:[%s272 + $0x1b0] sm:$0xff]
        %v369 = vld [vmem:[%s272 + $0x1b8] sm:$0xff]
        %v370 = vld [vmem:[%s272 + $0x1c0] sm:$0xff]
        %v371 = vld [vmem:[%s272 + $0x1c8] sm:$0xff]
        %v372 = vld [vmem:[%s272 + $0x1d0] sm:$0xff]
        %v373 = vld [vmem:[%s272 + $0x1d8] sm:$0xff]
        %v374 = vld [vmem:[%s272 + $0x1e0] sm:$0xff]
        %v375 = vld [vmem:[%s272 + $0x1e8] sm:$0xff]
        %v376 = vld [vmem:[%s272 + $0x1f0] sm:$0xff]
        %v377 = vpack.c.bf16 %v315, %v314
        %v378 = vpack.c.bf16 %v317, %v316
        %v379 = vpack.c.bf16 %v319, %v318
        %v380 = vpack.c.bf16 %v321, %v320
        %v381 = vpack.c.bf16 %v323, %v322
        %v382 = vpack.c.bf16 %v325, %v324
        %v383 = vpack.c.bf16 %v327, %v326
        %v384 = vpack.c.bf16 %v329, %v328
        %v385 = vpack.c.bf16 %v331, %v330
        %v386 = vpack.c.bf16 %v333, %v332
        %v387 = vpack.c.bf16 %v335, %v334
        %v388 = vpack.c.bf16 %v337, %v336
        %v389 = vpack.c.bf16 %v339, %v338
        %v390 = vpack.c.bf16 %v341, %v340
        %v391 = vpack.c.bf16 %v343, %v342
        %v392 = vpack.c.bf16 %v345, %v344
        %v393 = vpack.c.bf16 %v347, %v346
        %v394 = vpack.c.bf16 %v349, %v348
        %v395 = vpack.c.bf16 %v351, %v350
        %v396 = vpack.c.bf16 %v353, %v352
        %v397 = vpack.c.bf16 %v355, %v354
        %v398 = vpack.c.bf16 %v357, %v356
        %v399 = vpack.c.bf16 %v359, %v358
        %v400 = vpack.c.bf16 %v361, %v360
        %v401 = vpack.c.bf16 %v363, %v362
        %v402 = vpack.c.bf16 %v365, %v364
        %v403 = vpack.c.bf16 %v367, %v366
        %v404 = vpack.c.bf16 %v369, %v368
        %v405 = vpack.c.bf16 %v371, %v370
        %v406 = vpack.c.bf16 %v373, %v372
        %v407 = vpack.c.bf16 %v375, %v374
        %v408 = vpack.c.bf16 %v376, %v376
        %v409 = vld [vmem:[%s1] sm:$0xf]
        %v410 = vld [vmem:[%s1 + $0x4] sm:$0xf]
        %v411 = vld [vmem:[%s1 + $0x8] sm:$0xf]
        %v412 = vld [vmem:[%s1 + $0xc] sm:$0xf]
        %v413 = vld [vmem:[%s1 + $0x10] sm:$0xf]
        %v414 = vld [vmem:[%s1 + $0x14] sm:$0xf]
        %v415 = vld [vmem:[%s1 + $0x18] sm:$0xf]
        %v416 = vld [vmem:[%s1 + $0x1c] sm:$0xf]
        %v417 = vld [vmem:[%s1 + $0x20] sm:$0xf]
        %v418 = vld [vmem:[%s1 + $0x24] sm:$0xf]
        %v419 = vld [vmem:[%s1 + $0x28] sm:$0xf]
        %v420 = vld [vmem:[%s1 + $0x2c] sm:$0xf]
        %v421 = vld [vmem:[%s1 + $0x30] sm:$0xf]
        %v422 = vld [vmem:[%s1 + $0x34] sm:$0xf]
        %v423 = vld [vmem:[%s1 + $0x38] sm:$0xf]
        %v424 = vld [vmem:[%s1 + $0x3c] sm:$0xf]
        %v425 = vld [vmem:[%s2] sm:$0x1]
        %v427 = vlaneseq
        %v428 = vshrl.u32 %v427, 7
        %v429 = vsub.s32 0, %v428
        %v430 = vrot.slane %v425, %v429
        %v448 = vunpack.c.l.b16 %v409
        %v449 = vunpack.c.l.b16 %v410
        %v450 = vunpack.c.l.b16 %v411
        %v451 = vunpack.c.l.b16 %v412
        %v452 = vunpack.c.l.b16 %v413
        %v453 = vunpack.c.l.b16 %v414
        %v454 = vunpack.c.l.b16 %v415
        %v455 = vunpack.c.l.b16 %v416
        %v456 = vunpack.c.l.b16 %v417
        %v457 = vunpack.c.l.b16 %v418
        %v458 = vunpack.c.l.b16 %v419
        %v459 = vunpack.c.l.b16 %v420
        %v460 = vunpack.c.l.b16 %v421
        %v461 = vunpack.c.l.b16 %v422
        %v462 = vunpack.c.l.b16 %v423
        %v463 = vunpack.c.l.b16 %v424
        %v464 = vpack.c.b16 %v449, %v448
        %v465 = vpack.c.b16 %v451, %v450
        %v466 = vpack.c.b16 %v453, %v452
        %v467 = vpack.c.b16 %v455, %v454
        %v468 = vpack.c.b16 %v457, %v456
        %v469 = vpack.c.b16 %v459, %v458
        %v470 = vpack.c.b16 %v461, %v460
        %v471 = vpack.c.b16 %v463, %v462
        %480 = vmatprep.subr.bf16.mxu0 0
        %481 = vmatpush1.bf16.msra.mxu0 %v464
        %482 = vmatprep.subr.bf16.mxu0 0
        %483 = vmatpush1.bf16.msra.mxu0 %v465
        %484 = vmatprep.subr.bf16.mxu0 0
        %485 = vmatpush1.bf16.msra.mxu0 %v466
        %486 = vmatprep.subr.bf16.mxu0 0
        %487 = vmatpush1.bf16.msra.mxu0 %v467
        %488 = vmatprep.subr.bf16.mxu0 0
        %489 = vmatpush1.bf16.msra.mxu0 %v468
        %490 = vmatprep.subr.bf16.mxu0 0
        %491 = vmatpush1.bf16.msra.mxu0 %v469
        %492 = vmatprep.subr.bf16.mxu0 0
        %493 = vmatpush1.bf16.msra.mxu0 %v470
        %494 = vmatprep.subr.bf16.mxu0 0
        %495 = vmatpush1.bf16.msra.mxu0 %v471
        %496 = vmatprep.subr.bf16.mxu0 0
        %497 = vmatpush1.bf16.msra.mxu0 0
        %498 = vmatprep.subr.bf16.mxu0 0
        %499 = vmatpush1.bf16.msra.mxu0 0
        %500 = vmatprep.subr.bf16.mxu0 0
        %501 = vmatpush1.bf16.msra.mxu0 0
        %502 = vmatprep.subr.bf16.mxu0 0
        %503 = vmatpush1.bf16.msra.mxu0 0
        %504 = vmatprep.subr.bf16.mxu0 0
        %505 = vmatpush1.bf16.msra.mxu0 0
        %506 = vmatprep.subr.bf16.mxu0 0
        %507 = vmatpush1.bf16.msra.mxu0 0
        %508 = vmatprep.subr.bf16.mxu0 0
        %509 = vmatpush1.bf16.msra.mxu0 0
        %510 = vmatprep.subr.bf16.mxu0 0
        %511 = vmatpush1.bf16.msra.mxu0 0
        %512 = vmatprep.mubr.bf16.mxu0 0
        %513 = vmatmul.mubr.bf16.gmra.mrb[0].mxu0 %v377
        %v514 = vpop.f32.mrb[0].mxu0
        %v515 = vadd.f32 %v430, %v514
        %v516 = vpop.f32.mrb[0].mxu0
        %v517 = vpop.f32.mrb[0].mxu0
        %v518 = vadd.f32 %v430, %v517
        %v519 = vpop.f32.mrb[0].mxu0
        %520 = vmatprep.mubr.bf16.mxu0 0
        %521 = vmatmul.mubr.bf16.gmra.mrb[0].mxu0 %v378
        %v522 = vpop.f32.mrb[0].mxu0
        %v523 = vadd.f32 %v430, %v522
        %v524 = vpop.f32.mrb[0].mxu0
        %v525 = vpop.f32.mrb[0].mxu0
        %v526 = vadd.f32 %v430, %v525
        %v527 = vpop.f32.mrb[0].mxu0
        %528 = vmatprep.mubr.bf16.mxu0 0
        %529 = vmatmul.mubr.bf16.gmra.mrb[0].mxu0 %v379
        %v530 = vpop.f32.mrb[0].mxu0
        %v531 = vadd.f32 %v430, %v530
        %v532 = vpop.f32.mrb[0].mxu0
        %v533 = vpop.f32.mrb[0].mxu0
        %v534 = vadd.f32 %v430, %v533
        %v535 = vpop.f32.mrb[0].mxu0
        %536 = vmatprep.mubr.bf16.mxu0 0
        %537 = vmatmul.mubr.bf16.gmra.mrb[0].mxu0 %v380
        %v538 = vpop.f32.mrb[0].mxu0
        %v539 = vadd.f32 %v430, %v538
        %v540 = vpop.f32.mrb[0].mxu0
        %v541 = vpop.f32.mrb[0].mxu0
        %v542 = vadd.f32 %v430, %v541
        %v543 = vpop.f32.mrb[0].mxu0
        %544 = vmatprep.mubr.bf16.mxu0 0
        %545 = vmatmul.mubr.bf16.gmra.mrb[0].mxu0 %v381
        %v546 = vpop.f32.mrb[0].mxu0
        %v547 = vadd.f32 %v430, %v546
        %v548 = vpop.f32.mrb[0].mxu0
        %v549 = vpop.f32.mrb[0].mxu0
        %v550 = vadd.f32 %v430, %v549
        %v551 = vpop.f32.mrb[0].mxu0
        %552 = vmatprep.mubr.bf16.mxu0 0
        %553 = vmatmul.mubr.bf16.gmra.mrb[0].mxu0 %v382
        %v554 = vpop.f32.mrb[0].mxu0
        %v555 = vadd.f32 %v430, %v554
        %v556 = vpop.f32.mrb[0].mxu0
        %v557 = vpop.f32.mrb[0].mxu0
        %v558 = vadd.f32 %v430, %v557
        %v559 = vpop.f32.mrb[0].mxu0
        %560 = vmatprep.mubr.bf16.mxu0 0
        %561 = vmatmul.mubr.bf16.gmra.mrb[0].mxu0 %v383
        %v562 = vpop.f32.mrb[0].mxu0
        %v563 = vadd.f32 %v430, %v562
        %v564 = vpop.f32.mrb[0].mxu0
        %v565 = vpop.f32.mrb[0].mxu0
        %v566 = vadd.f32 %v430, %v565
        %v567 = vpop.f32.mrb[0].mxu0
        %568 = vmatprep.mubr.bf16.mxu0 0
        %569 = vmatmul.mubr.bf16.gmra.mrb[0].mxu0 %v384
        %v570 = vpop.f32.mrb[0].mxu0
        %v571 = vadd.f32 %v430, %v570
        %v572 = vpop.f32.mrb[0].mxu0
        %v573 = vpop.f32.mrb[0].mxu0
        %v574 = vadd.f32 %v430, %v573
        %v575 = vpop.f32.mrb[0].mxu0
        %576 = vmatprep.mubr.bf16.mxu0 0
        %577 = vmatmul.mubr.bf16.gmra.mrb[0].mxu0 %v385
        %v578 = vpop.f32.mrb[0].mxu0
        %v579 = vadd.f32 %v430, %v578
        %v580 = vpop.f32.mrb[0].mxu0
        %v581 = vpop.f32.mrb[0].mxu0
        %v582 = vadd.f32 %v430, %v581
        %v583 = vpop.f32.mrb[0].mxu0
        %584 = vmatprep.mubr.bf16.mxu0 0
        %585 = vmatmul.mubr.bf16.gmra.mrb[0].mxu0 %v386
        %v586 = vpop.f32.mrb[0].mxu0
        %v587 = vadd.f32 %v430, %v586
        %v588 = vpop.f32.mrb[0].mxu0
        %v589 = vpop.f32.mrb[0].mxu0
        %v590 = vadd.f32 %v430, %v589
        %v591 = vpop.f32.mrb[0].mxu0
        %592 = vmatprep.mubr.bf16.mxu0 0
        %593 = vmatmul.mubr.bf16.gmra.mrb[0].mxu0 %v387
        %v594 = vpop.f32.mrb[0].mxu0
        %v595 = vadd.f32 %v430, %v594
        %v596 = vpop.f32.mrb[0].mxu0
        %v597 = vpop.f32.mrb[0].mxu0
        %v598 = vadd.f32 %v430, %v597
        %v599 = vpop.f32.mrb[0].mxu0
        %600 = vmatprep.mubr.bf16.mxu0 0
        %601 = vmatmul.mubr.bf16.gmra.mrb[0].mxu0 %v388
        %v602 = vpop.f32.mrb[0].mxu0
        %v603 = vadd.f32 %v430, %v602
        %v604 = vpop.f32.mrb[0].mxu0
        %v605 = vpop.f32.mrb[0].mxu0
        %v606 = vadd.f32 %v430, %v605
        %v607 = vpop.f32.mrb[0].mxu0
        %608 = vmatprep.mubr.bf16.mxu0 0
        %609 = vmatmul.mubr.bf16.gmra.mrb[0].mxu0 %v389
        %v610 = vpop.f32.mrb[0].mxu0
        %v611 = vadd.f32 %v430, %v610
        %v612 = vpop.f32.mrb[0].mxu0
        %v613 = vpop.f32.mrb[0].mxu0
        %v614 = vadd.f32 %v430, %v613
        %v615 = vpop.f32.mrb[0].mxu0
        %616 = vmatprep.mubr.bf16.mxu0 0
        %617 = vmatmul.mubr.bf16.gmra.mrb[0].mxu0 %v390
        %v618 = vpop.f32.mrb[0].mxu0
        %v619 = vadd.f32 %v430, %v618
        %v620 = vpop.f32.mrb[0].mxu0
        %v621 = vpop.f32.mrb[0].mxu0
        %v622 = vadd.f32 %v430, %v621
        %v623 = vpop.f32.mrb[0].mxu0
        %624 = vmatprep.mubr.bf16.mxu0 0
        %625 = vmatmul.mubr.bf16.gmra.mrb[0].mxu0 %v391
        %v626 = vpop.f32.mrb[0].mxu0
        %v627 = vadd.f32 %v430, %v626
        %v628 = vpop.f32.mrb[0].mxu0
        %v629 = vpop.f32.mrb[0].mxu0
        %v630 = vadd.f32 %v430, %v629
        %v631 = vpop.f32.mrb[0].mxu0
        %632 = vmatprep.mubr.bf16.mxu0 0
        %633 = vmatmul.mubr.bf16.gmra.mrb[0].mxu0 %v392
        %v634 = vpop.f32.mrb[0].mxu0
        %v635 = vadd.f32 %v430, %v634
        %v636 = vpop.f32.mrb[0].mxu0
        %v637 = vpop.f32.mrb[0].mxu0
        %v638 = vadd.f32 %v430, %v637
        %v639 = vpop.f32.mrb[0].mxu0
        %640 = vmatprep.mubr.bf16.mxu0 0
        %641 = vmatmul.mubr.bf16.gmra.mrb[0].mxu0 %v393
        %v642 = vpop.f32.mrb[0].mxu0
        %v643 = vadd.f32 %v430, %v642
        %v644 = vpop.f32.mrb[0].mxu0
        %v645 = vpop.f32.mrb[0].mxu0
        %v646 = vadd.f32 %v430, %v645
        %v647 = vpop.f32.mrb[0].mxu0
        %648 = vmatprep.mubr.bf16.mxu0 0
        %649 = vmatmul.mubr.bf16.gmra.mrb[0].mxu0 %v394
        %v650 = vpop.f32.mrb[0].mxu0
        %v651 = vadd.f32 %v430, %v650
        %v652 = vpop.f32.mrb[0].mxu0
        %v653 = vpop.f32.mrb[0].mxu0
        %v654 = vadd.f32 %v430, %v653
        %v655 = vpop.f32.mrb[0].mxu0
        %656 = vmatprep.mubr.bf16.mxu0 0
        %657 = vmatmul.mubr.bf16.gmra.mrb[0].mxu0 %v395
        %v658 = vpop.f32.mrb[0].mxu0
        %v659 = vadd.f32 %v430, %v658
        %v660 = vpop.f32.mrb[0].mxu0
        %v661 = vpop.f32.mrb[0].mxu0
        %v662 = vadd.f32 %v430, %v661
        %v663 = vpop.f32.mrb[0].mxu0
        %664 = vmatprep.mubr.bf16.mxu0 0
        %665 = vmatmul.mubr.bf16.gmra.mrb[0].mxu0 %v396
        %v666 = vpop.f32.mrb[0].mxu0
        %v667 = vadd.f32 %v430, %v666
        %v668 = vpop.f32.mrb[0].mxu0
        %v669 = vpop.f32.mrb[0].mxu0
        %v670 = vadd.f32 %v430, %v669
        %v671 = vpop.f32.mrb[0].mxu0
        %672 = vmatprep.mubr.bf16.mxu0 0
        %673 = vmatmul.mubr.bf16.gmra.mrb[0].mxu0 %v397
        %v674 = vpop.f32.mrb[0].mxu0
        %v675 = vadd.f32 %v430, %v674
        %v676 = vpop.f32.mrb[0].mxu0
        %v677 = vpop.f32.mrb[0].mxu0
        %v678 = vadd.f32 %v430, %v677
        %v679 = vpop.f32.mrb[0].mxu0
        %680 = vmatprep.mubr.bf16.mxu0 0
        %681 = vmatmul.mubr.bf16.gmra.mrb[0].mxu0 %v398
        %v682 = vpop.f32.mrb[0].mxu0
        %v683 = vadd.f32 %v430, %v682
        %v684 = vpop.f32.mrb[0].mxu0
        %v685 = vpop.f32.mrb[0].mxu0
        %v686 = vadd.f32 %v430, %v685
        %v687 = vpop.f32.mrb[0].mxu0
        %688 = vmatprep.mubr.bf16.mxu0 0
        %689 = vmatmul.mubr.bf16.gmra.mrb[0].mxu0 %v399
        %v690 = vpop.f32.mrb[0].mxu0
        %v691 = vadd.f32 %v430, %v690
        %v692 = vpop.f32.mrb[0].mxu0
        %v693 = vpop.f32.mrb[0].mxu0
        %v694 = vadd.f32 %v430, %v693
        %v695 = vpop.f32.mrb[0].mxu0
        %696 = vmatprep.mubr.bf16.mxu0 0
        %697 = vmatmul.mubr.bf16.gmra.mrb[0].mxu0 %v400
        %v698 = vpop.f32.mrb[0].mxu0
        %v699 = vadd.f32 %v430, %v698
        %v700 = vpop.f32.mrb[0].mxu0
        %v701 = vpop.f32.mrb[0].mxu0
        %v702 = vadd.f32 %v430, %v701
        %v703 = vpop.f32.mrb[0].mxu0
        %704 = vmatprep.mubr.bf16.mxu0 0
        %705 = vmatmul.mubr.bf16.gmra.mrb[0].mxu0 %v401
        %v706 = vpop.f32.mrb[0].mxu0
        %v707 = vadd.f32 %v430, %v706
        %v708 = vpop.f32.mrb[0].mxu0
        %v709 = vpop.f32.mrb[0].mxu0
        %v710 = vadd.f32 %v430, %v709
        %v711 = vpop.f32.mrb[0].mxu0
        %712 = vmatprep.mubr.bf16.mxu0 0
        %713 = vmatmul.mubr.bf16.gmra.mrb[0].mxu0 %v402
        %v714 = vpop.f32.mrb[0].mxu0
        %v715 = vadd.f32 %v430, %v714
        %v716 = vpop.f32.mrb[0].mxu0
        %v717 = vpop.f32.mrb[0].mxu0
        %v718 = vadd.f32 %v430, %v717
        %v719 = vpop.f32.mrb[0].mxu0
        %720 = vmatprep.mubr.bf16.mxu0 0
        %721 = vmatmul.mubr.bf16.gmra.mrb[0].mxu0 %v403
        %v722 = vpop.f32.mrb[0].mxu0
        %v723 = vadd.f32 %v430, %v722
        %v724 = vpop.f32.mrb[0].mxu0
        %v725 = vpop.f32.mrb[0].mxu0
        %v726 = vadd.f32 %v430, %v725
        %v727 = vpop.f32.mrb[0].mxu0
        %728 = vmatprep.mubr.bf16.mxu0 0
        %729 = vmatmul.mubr.bf16.gmra.mrb[0].mxu0 %v404
        %v730 = vpop.f32.mrb[0].mxu0
        %v731 = vadd.f32 %v430, %v730
        %v732 = vpop.f32.mrb[0].mxu0
        %v733 = vpop.f32.mrb[0].mxu0
        %v734 = vadd.f32 %v430, %v733
        %v735 = vpop.f32.mrb[0].mxu0
        %736 = vmatprep.mubr.bf16.mxu0 0
        %737 = vmatmul.mubr.bf16.gmra.mrb[0].mxu0 %v405
        %v738 = vpop.f32.mrb[0].mxu0
        %v739 = vadd.f32 %v430, %v738
        %v740 = vpop.f32.mrb[0].mxu0
        %v741 = vpop.f32.mrb[0].mxu0
        %v742 = vadd.f32 %v430, %v741
        %v743 = vpop.f32.mrb[0].mxu0
        %744 = vmatprep.mubr.bf16.mxu0 0
        %745 = vmatmul.mubr.bf16.gmra.mrb[0].mxu0 %v406
        %v746 = vpop.f32.mrb[0].mxu0
        %v747 = vadd.f32 %v430, %v746
        %v748 = vpop.f32.mrb[0].mxu0
        %v749 = vpop.f32.mrb[0].mxu0
        %v750 = vadd.f32 %v430, %v749
        %v751 = vpop.f32.mrb[0].mxu0
        %752 = vmatprep.mubr.bf16.mxu0 0
        %753 = vmatmul.mubr.bf16.gmra.mrb[0].mxu0 %v407
        %v754 = vpop.f32.mrb[0].mxu0
        %v755 = vadd.f32 %v430, %v754
        %v756 = vpop.f32.mrb[0].mxu0
        %v757 = vpop.f32.mrb[0].mxu0
        %v758 = vadd.f32 %v430, %v757
        %v759 = vpop.f32.mrb[0].mxu0
        %760 = vmatprep.mubr.bf16.mxu0 0
        %761 = vmatmul.mubr.bf16.gmra.mrb[0].mxu0 %v408
        %v762 = vpop.f32.mrb[0].mxu0
        %v763 = vadd.f32 %v430, %v762
        %v764 = vpop.f32.mrb[0].mxu0
        %v765 = vpop.f32.mrb[0].mxu0
        %v766 = vpop.f32.mrb[0].mxu0
        %767 = vdwg.mxu0
        %v768 = vmax.f32 %v515, 0.0
        %v769 = vmax.f32 %v518, 0.0
        %v770 = vmax.f32 %v523, 0.0
        %v771 = vmax.f32 %v526, 0.0
        %v772 = vmax.f32 %v531, 0.0
        %v773 = vmax.f32 %v534, 0.0
        %v774 = vmax.f32 %v539, 0.0
        %v775 = vmax.f32 %v542, 0.0
        %v776 = vmax.f32 %v547, 0.0
        %v777 = vmax.f32 %v550, 0.0
        %v778 = vmax.f32 %v555, 0.0
        %v779 = vmax.f32 %v558, 0.0
        %v780 = vmax.f32 %v563, 0.0
        %v781 = vmax.f32 %v566, 0.0
        %v782 = vmax.f32 %v571, 0.0
        %v783 = vmax.f32 %v574, 0.0
        %v784 = vmax.f32 %v579, 0.0
        %v785 = vmax.f32 %v582, 0.0
        %v786 = vmax.f32 %v587, 0.0
        %v787 = vmax.f32 %v590, 0.0
        %v788 = vmax.f32 %v595, 0.0
        %v789 = vmax.f32 %v598, 0.0
        %v790 = vmax.f32 %v603, 0.0
        %v791 = vmax.f32 %v606, 0.0
        %v792 = vmax.f32 %v611, 0.0
        %v793 = vmax.f32 %v614, 0.0
        %v794 = vmax.f32 %v619, 0.0
        %v795 = vmax.f32 %v622, 0.0
        %v796 = vmax.f32 %v627, 0.0
        %v797 = vmax.f32 %v630, 0.0
        %v798 = vmax.f32 %v635, 0.0
        %v799 = vmax.f32 %v638, 0.0
        %v800 = vmax.f32 %v643, 0.0
        %v801 = vmax.f32 %v646, 0.0
        %v802 = vmax.f32 %v651, 0.0
        %v803 = vmax.f32 %v654, 0.0
        %v804 = vmax.f32 %v659, 0.0
        %v805 = vmax.f32 %v662, 0.0
        %v806 = vmax.f32 %v667, 0.0
        %v807 = vmax.f32 %v670, 0.0
        %v808 = vmax.f32 %v675, 0.0
        %v809 = vmax.f32 %v678, 0.0
        %v810 = vmax.f32 %v683, 0.0
        %v811 = vmax.f32 %v686, 0.0
        %v812 = vmax.f32 %v691, 0.0
        %v813 = vmax.f32 %v694, 0.0
        %v814 = vmax.f32 %v699, 0.0
        %v815 = vmax.f32 %v702, 0.0
        %v816 = vmax.f32 %v707, 0.0
        %v817 = vmax.f32 %v710, 0.0
        %v818 = vmax.f32 %v715, 0.0
        %v819 = vmax.f32 %v718, 0.0
        %v820 = vmax.f32 %v723, 0.0
        %v821 = vmax.f32 %v726, 0.0
        %v822 = vmax.f32 %v731, 0.0
        %v823 = vmax.f32 %v734, 0.0
        %v824 = vmax.f32 %v739, 0.0
        %v825 = vmax.f32 %v742, 0.0
        %v826 = vmax.f32 %v747, 0.0
        %v827 = vmax.f32 %v750, 0.0
        %v828 = vmax.f32 %v755, 0.0
        %v829 = vmax.f32 %v758, 0.0
        %v830 = vmax.f32 %v763, 0.0
        %v831 = vpack.c.bf16 %v769, %v768
        %v832 = vpack.c.bf16 %v771, %v770
        %v833 = vpack.c.bf16 %v773, %v772
        %v834 = vpack.c.bf16 %v775, %v774
        %v835 = vpack.c.bf16 %v777, %v776
        %v836 = vpack.c.bf16 %v779, %v778
        %v837 = vpack.c.bf16 %v781, %v780
        %v838 = vpack.c.bf16 %v783, %v782
        %v839 = vpack.c.bf16 %v785, %v784
        %v840 = vpack.c.bf16 %v787, %v786
        %v841 = vpack.c.bf16 %v789, %v788
        %v842 = vpack.c.bf16 %v791, %v790
        %v843 = vpack.c.bf16 %v793, %v792
        %v844 = vpack.c.bf16 %v795, %v794
        %v845 = vpack.c.bf16 %v797, %v796
        %v846 = vpack.c.bf16 %v799, %v798
        %v847 = vpack.c.bf16 %v801, %v800
        %v848 = vpack.c.bf16 %v803, %v802
        %v849 = vpack.c.bf16 %v805, %v804
        %v850 = vpack.c.bf16 %v807, %v806
        %v851 = vpack.c.bf16 %v809, %v808
        %v852 = vpack.c.bf16 %v811, %v810
        %v853 = vpack.c.bf16 %v813, %v812
        %v854 = vpack.c.bf16 %v815, %v814
        %v855 = vpack.c.bf16 %v817, %v816
        %v856 = vpack.c.bf16 %v819, %v818
        %v857 = vpack.c.bf16 %v821, %v820
        %v858 = vpack.c.bf16 %v823, %v822
        %v859 = vpack.c.bf16 %v825, %v824
        %v860 = vpack.c.bf16 %v827, %v826
        %v861 = vpack.c.bf16 %v829, %v828
        %v862 = vpack.c.bf16 %v830, %v830
        %v863 = vld [vmem:[%s3] sm:$0xf]
        %v864 = vld [vmem:[%s3 + $0x4] sm:$0xf]
        %v865 = vld [vmem:[%s3 + $0x8] sm:$0xf]
        %v866 = vld [vmem:[%s3 + $0xc] sm:$0xf]
        %v867 = vld [vmem:[%s3 + $0x10] sm:$0xf]
        %v868 = vld [vmem:[%s3 + $0x14] sm:$0xf]
        %v869 = vld [vmem:[%s3 + $0x18] sm:$0xf]
        %v870 = vld [vmem:[%s3 + $0x1c] sm:$0xf]
        %v871 = vld [vmem:[%s3 + $0x20] sm:$0xf]
        %v872 = vld [vmem:[%s3 + $0x24] sm:$0xf]
        %v873 = vld [vmem:[%s3 + $0x28] sm:$0xf]
        %v874 = vld [vmem:[%s3 + $0x2c] sm:$0xf]
        %v875 = vld [vmem:[%s3 + $0x30] sm:$0xf]
        %v876 = vld [vmem:[%s3 + $0x34] sm:$0xf]
        %v877 = vld [vmem:[%s3 + $0x38] sm:$0xf]
        %v878 = vld [vmem:[%s3 + $0x3c] sm:$0xf]
        %v879 = vld [vmem:[%s4] sm:$0x1]
        %v881 = vlaneseq
        %v882 = vshrl.u32 %v881, 7
        %v883 = vsub.s32 0, %v882
        %v884 = vrot.slane %v879, %v883
        %v902 = vunpack.c.l.b16 %v863
        %v903 = vunpack.c.l.b16 %v864
        %v904 = vunpack.c.l.b16 %v865
        %v905 = vunpack.c.l.b16 %v866
        %v906 = vunpack.c.l.b16 %v867
        %v907 = vunpack.c.l.b16 %v868
        %v908 = vunpack.c.l.b16 %v869
        %v909 = vunpack.c.l.b16 %v870
        %v910 = vunpack.c.l.b16 %v871
        %v911 = vunpack.c.l.b16 %v872
        %v912 = vunpack.c.l.b16 %v873
        %v913 = vunpack.c.l.b16 %v874
        %v914 = vunpack.c.l.b16 %v875
        %v915 = vunpack.c.l.b16 %v876
        %v916 = vunpack.c.l.b16 %v877
        %v917 = vunpack.c.l.b16 %v878
        %v918 = vpack.c.b16 %v903, %v902
        %v919 = vpack.c.b16 %v905, %v904
        %v920 = vpack.c.b16 %v907, %v906
        %v921 = vpack.c.b16 %v909, %v908
        %v922 = vpack.c.b16 %v911, %v910
        %v923 = vpack.c.b16 %v913, %v912
        %v924 = vpack.c.b16 %v915, %v914
        %v925 = vpack.c.b16 %v917, %v916
        %934 = vmatprep.subr.bf16.mxu0 0
        %935 = vmatpush1.bf16.msra.mxu0 %v918
        %936 = vmatprep.subr.bf16.mxu0 0
        %937 = vmatpush1.bf16.msra.mxu0 %v919
        %938 = vmatprep.subr.bf16.mxu0 0
        %939 = vmatpush1.bf16.msra.mxu0 %v920
        %940 = vmatprep.subr.bf16.mxu0 0
        %941 = vmatpush1.bf16.msra.mxu0 %v921
        %942 = vmatprep.subr.bf16.mxu0 0
        %943 = vmatpush1.bf16.msra.mxu0 %v922
        %944 = vmatprep.subr.bf16.mxu0 0
        %945 = vmatpush1.bf16.msra.mxu0 %v923
        %946 = vmatprep.subr.bf16.mxu0 0
        %947 = vmatpush1.bf16.msra.mxu0 %v924
        %948 = vmatprep.subr.bf16.mxu0 0
        %949 = vmatpush1.bf16.msra.mxu0 %v925
        %950 = vmatprep.subr.bf16.mxu0 0
        %951 = vmatpush1.bf16.msra.mxu0 0
        %952 = vmatprep.subr.bf16.mxu0 0
        %953 = vmatpush1.bf16.msra.mxu0 0
        %954 = vmatprep.subr.bf16.mxu0 0
        %955 = vmatpush1.bf16.msra.mxu0 0
        %956 = vmatprep.subr.bf16.mxu0 0
        %957 = vmatpush1.bf16.msra.mxu0 0
        %958 = vmatprep.subr.bf16.mxu0 0
        %959 = vmatpush1.bf16.msra.mxu0 0
        %960 = vmatprep.subr.bf16.mxu0 0
        %961 = vmatpush1.bf16.msra.mxu0 0
        %962 = vmatprep.subr.bf16.mxu0 0
        %963 = vmatpush1.bf16.msra.mxu0 0
        %964 = vmatprep.subr.bf16.mxu0 0
        %965 = vmatpush1.bf16.msra.mxu0 0
        %966 = vmatprep.mubr.bf16.mxu0 0
        %967 = vmatmul.mubr.bf16.gmra.mrb[0].mxu0 %v831
        %v968 = vpop.f32.mrb[0].mxu0
        %v969 = vadd.f32 %v884, %v968
        %v970 = vpop.f32.mrb[0].mxu0
        %v971 = vpop.f32.mrb[0].mxu0
        %v972 = vadd.f32 %v884, %v971
        %v973 = vpop.f32.mrb[0].mxu0
        %974 = vmatprep.mubr.bf16.mxu0 0
        %975 = vmatmul.mubr.bf16.gmra.mrb[0].mxu0 %v832
        %v976 = vpop.f32.mrb[0].mxu0
        %v977 = vadd.f32 %v884, %v976
        %v978 = vpop.f32.mrb[0].mxu0
        %v979 = vpop.f32.mrb[0].mxu0
        %v980 = vadd.f32 %v884, %v979
        %v981 = vpop.f32.mrb[0].mxu0
        %982 = vmatprep.mubr.bf16.mxu0 0
        %983 = vmatmul.mubr.bf16.gmra.mrb[0].mxu0 %v833
        %v984 = vpop.f32.mrb[0].mxu0
        %v985 = vadd.f32 %v884, %v984
        %v986 = vpop.f32.mrb[0].mxu0
        %v987 = vpop.f32.mrb[0].mxu0
        %v988 = vadd.f32 %v884, %v987
        %v989 = vpop.f32.mrb[0].mxu0
        %990 = vmatprep.mubr.bf16.mxu0 0
        %991 = vmatmul.mubr.bf16.gmra.mrb[0].mxu0 %v834
        %v992 = vpop.f32.mrb[0].mxu0
        %v993 = vadd.f32 %v884, %v992
        %v994 = vpop.f32.mrb[0].mxu0
        %v995 = vpop.f32.mrb[0].mxu0
        %v996 = vadd.f32 %v884, %v995
        %v997 = vpop.f32.mrb[0].mxu0
        %998 = vmatprep.mubr.bf16.mxu0 0
        %999 = vmatmul.mubr.bf16.gmra.mrb[0].mxu0 %v835
        %v1000 = vpop.f32.mrb[0].mxu0
        %v1001 = vadd.f32 %v884, %v1000
        %v1002 = vpop.f32.mrb[0].mxu0
        %v1003 = vpop.f32.mrb[0].mxu0
        %v1004 = vadd.f32 %v884, %v1003
        %v1005 = vpop.f32.mrb[0].mxu0
        %1006 = vmatprep.mubr.bf16.mxu0 0
        %1007 = vmatmul.mubr.bf16.gmra.mrb[0].mxu0 %v836
        %v1008 = vpop.f32.mrb[0].mxu0
        %v1009 = vadd.f32 %v884, %v1008
        %v1010 = vpop.f32.mrb[0].mxu0
        %v1011 = vpop.f32.mrb[0].mxu0
        %v1012 = vadd.f32 %v884, %v1011
        %v1013 = vpop.f32.mrb[0].mxu0
        %1014 = vmatprep.mubr.bf16.mxu0 0
        %1015 = vmatmul.mubr.bf16.gmra.mrb[0].mxu0 %v837
        %v1016 = vpop.f32.mrb[0].mxu0
        %v1017 = vadd.f32 %v884, %v1016
        %v1018 = vpop.f32.mrb[0].mxu0
        %v1019 = vpop.f32.mrb[0].mxu0
        %v1020 = vadd.f32 %v884, %v1019
        %v1021 = vpop.f32.mrb[0].mxu0
        %1022 = vmatprep.mubr.bf16.mxu0 0
        %1023 = vmatmul.mubr.bf16.gmra.mrb[0].mxu0 %v838
        %v1024 = vpop.f32.mrb[0].mxu0
        %v1025 = vadd.f32 %v884, %v1024
        %v1026 = vpop.f32.mrb[0].mxu0
        %v1027 = vpop.f32.mrb[0].mxu0
        %v1028 = vadd.f32 %v884, %v1027
        %v1029 = vpop.f32.mrb[0].mxu0
        %1030 = vmatprep.mubr.bf16.mxu0 0
        %1031 = vmatmul.mubr.bf16.gmra.mrb[0].mxu0 %v839
        %v1032 = vpop.f32.mrb[0].mxu0
        %v1033 = vadd.f32 %v884, %v1032
        %v1034 = vpop.f32.mrb[0].mxu0
        %v1035 = vpop.f32.mrb[0].mxu0
        %v1036 = vadd.f32 %v884, %v1035
        %v1037 = vpop.f32.mrb[0].mxu0
        %1038 = vmatprep.mubr.bf16.mxu0 0
        %1039 = vmatmul.mubr.bf16.gmra.mrb[0].mxu0 %v840
        %v1040 = vpop.f32.mrb[0].mxu0
        %v1041 = vadd.f32 %v884, %v1040
        %v1042 = vpop.f32.mrb[0].mxu0
        %v1043 = vpop.f32.mrb[0].mxu0
        %v1044 = vadd.f32 %v884, %v1043
        %v1045 = vpop.f32.mrb[0].mxu0
        %1046 = vmatprep.mubr.bf16.mxu0 0
        %1047 = vmatmul.mubr.bf16.gmra.mrb[0].mxu0 %v841
        %v1048 = vpop.f32.mrb[0].mxu0
        %v1049 = vadd.f32 %v884, %v1048
        %v1050 = vpop.f32.mrb[0].mxu0
        %v1051 = vpop.f32.mrb[0].mxu0
        %v1052 = vadd.f32 %v884, %v1051
        %v1053 = vpop.f32.mrb[0].mxu0
        %1054 = vmatprep.mubr.bf16.mxu0 0
        %1055 = vmatmul.mubr.bf16.gmra.mrb[0].mxu0 %v842
        %v1056 = vpop.f32.mrb[0].mxu0
        %v1057 = vadd.f32 %v884, %v1056
        %v1058 = vpop.f32.mrb[0].mxu0
        %v1059 = vpop.f32.mrb[0].mxu0
        %v1060 = vadd.f32 %v884, %v1059
        %v1061 = vpop.f32.mrb[0].mxu0
        %1062 = vmatprep.mubr.bf16.mxu0 0
        %1063 = vmatmul.mubr.bf16.gmra.mrb[0].mxu0 %v843
        %v1064 = vpop.f32.mrb[0].mxu0
        %v1065 = vadd.f32 %v884, %v1064
        %v1066 = vpop.f32.mrb[0].mxu0
        %v1067 = vpop.f32.mrb[0].mxu0
        %v1068 = vadd.f32 %v884, %v1067
        %v1069 = vpop.f32.mrb[0].mxu0
        %1070 = vmatprep.mubr.bf16.mxu0 0
        %1071 = vmatmul.mubr.bf16.gmra.mrb[0].mxu0 %v844
        %v1072 = vpop.f32.mrb[0].mxu0
        %v1073 = vadd.f32 %v884, %v1072
        %v1074 = vpop.f32.mrb[0].mxu0
        %v1075 = vpop.f32.mrb[0].mxu0
        %v1076 = vadd.f32 %v884, %v1075
        %v1077 = vpop.f32.mrb[0].mxu0
        %1078 = vmatprep.mubr.bf16.mxu0 0
        %1079 = vmatmul.mubr.bf16.gmra.mrb[0].mxu0 %v845
        %v1080 = vpop.f32.mrb[0].mxu0
        %v1081 = vadd.f32 %v884, %v1080
        %v1082 = vpop.f32.mrb[0].mxu0
        %v1083 = vpop.f32.mrb[0].mxu0
        %v1084 = vadd.f32 %v884, %v1083
        %v1085 = vpop.f32.mrb[0].mxu0
        %1086 = vmatprep.mubr.bf16.mxu0 0
        %1087 = vmatmul.mubr.bf16.gmra.mrb[0].mxu0 %v846
        %v1088 = vpop.f32.mrb[0].mxu0
        %v1089 = vadd.f32 %v884, %v1088
        %v1090 = vpop.f32.mrb[0].mxu0
        %v1091 = vpop.f32.mrb[0].mxu0
        %v1092 = vadd.f32 %v884, %v1091
        %v1093 = vpop.f32.mrb[0].mxu0
        %1094 = vmatprep.mubr.bf16.mxu0 0
        %1095 = vmatmul.mubr.bf16.gmra.mrb[0].mxu0 %v847
        %v1096 = vpop.f32.mrb[0].mxu0
        %v1097 = vadd.f32 %v884, %v1096
        %v1098 = vpop.f32.mrb[0].mxu0
        %v1099 = vpop.f32.mrb[0].mxu0
        %v1100 = vadd.f32 %v884, %v1099
        %v1101 = vpop.f32.mrb[0].mxu0
        %1102 = vmatprep.mubr.bf16.mxu0 0
        %1103 = vmatmul.mubr.bf16.gmra.mrb[0].mxu0 %v848
        %v1104 = vpop.f32.mrb[0].mxu0
        %v1105 = vadd.f32 %v884, %v1104
        %v1106 = vpop.f32.mrb[0].mxu0
        %v1107 = vpop.f32.mrb[0].mxu0
        %v1108 = vadd.f32 %v884, %v1107
        %v1109 = vpop.f32.mrb[0].mxu0
        %1110 = vmatprep.mubr.bf16.mxu0 0
        %1111 = vmatmul.mubr.bf16.gmra.mrb[0].mxu0 %v849
        %v1112 = vpop.f32.mrb[0].mxu0
        %v1113 = vadd.f32 %v884, %v1112
        %v1114 = vpop.f32.mrb[0].mxu0
        %v1115 = vpop.f32.mrb[0].mxu0
        %v1116 = vadd.f32 %v884, %v1115
        %v1117 = vpop.f32.mrb[0].mxu0
        %1118 = vmatprep.mubr.bf16.mxu0 0
        %1119 = vmatmul.mubr.bf16.gmra.mrb[0].mxu0 %v850
        %v1120 = vpop.f32.mrb[0].mxu0
        %v1121 = vadd.f32 %v884, %v1120
        %v1122 = vpop.f32.mrb[0].mxu0
        %v1123 = vpop.f32.mrb[0].mxu0
        %v1124 = vadd.f32 %v884, %v1123
        %v1125 = vpop.f32.mrb[0].mxu0
        %1126 = vmatprep.mubr.bf16.mxu0 0
        %1127 = vmatmul.mubr.bf16.gmra.mrb[0].mxu0 %v851
        %v1128 = vpop.f32.mrb[0].mxu0
        %v1129 = vadd.f32 %v884, %v1128
        %v1130 = vpop.f32.mrb[0].mxu0
        %v1131 = vpop.f32.mrb[0].mxu0
        %v1132 = vadd.f32 %v884, %v1131
        %v1133 = vpop.f32.mrb[0].mxu0
        %1134 = vmatprep.mubr.bf16.mxu0 0
        %1135 = vmatmul.mubr.bf16.gmra.mrb[0].mxu0 %v852
        %v1136 = vpop.f32.mrb[0].mxu0
        %v1137 = vadd.f32 %v884, %v1136
        %v1138 = vpop.f32.mrb[0].mxu0
        %v1139 = vpop.f32.mrb[0].mxu0
        %v1140 = vadd.f32 %v884, %v1139
        %v1141 = vpop.f32.mrb[0].mxu0
        %1142 = vmatprep.mubr.bf16.mxu0 0
        %1143 = vmatmul.mubr.bf16.gmra.mrb[0].mxu0 %v853
        %v1144 = vpop.f32.mrb[0].mxu0
        %v1145 = vadd.f32 %v884, %v1144
        %v1146 = vpop.f32.mrb[0].mxu0
        %v1147 = vpop.f32.mrb[0].mxu0
        %v1148 = vadd.f32 %v884, %v1147
        %v1149 = vpop.f32.mrb[0].mxu0
        %1150 = vmatprep.mubr.bf16.mxu0 0
        %1151 = vmatmul.mubr.bf16.gmra.mrb[0].mxu0 %v854
        %v1152 = vpop.f32.mrb[0].mxu0
        %v1153 = vadd.f32 %v884, %v1152
        %v1154 = vpop.f32.mrb[0].mxu0
        %v1155 = vpop.f32.mrb[0].mxu0
        %v1156 = vadd.f32 %v884, %v1155
        %v1157 = vpop.f32.mrb[0].mxu0
        %1158 = vmatprep.mubr.bf16.mxu0 0
        %1159 = vmatmul.mubr.bf16.gmra.mrb[0].mxu0 %v855
        %v1160 = vpop.f32.mrb[0].mxu0
        %v1161 = vadd.f32 %v884, %v1160
        %v1162 = vpop.f32.mrb[0].mxu0
        %v1163 = vpop.f32.mrb[0].mxu0
        %v1164 = vadd.f32 %v884, %v1163
        %v1165 = vpop.f32.mrb[0].mxu0
        %1166 = vmatprep.mubr.bf16.mxu0 0
        %1167 = vmatmul.mubr.bf16.gmra.mrb[0].mxu0 %v856
        %v1168 = vpop.f32.mrb[0].mxu0
        %v1169 = vadd.f32 %v884, %v1168
        %v1170 = vpop.f32.mrb[0].mxu0
        %v1171 = vpop.f32.mrb[0].mxu0
        %v1172 = vadd.f32 %v884, %v1171
        %v1173 = vpop.f32.mrb[0].mxu0
        %1174 = vmatprep.mubr.bf16.mxu0 0
        %1175 = vmatmul.mubr.bf16.gmra.mrb[0].mxu0 %v857
        %v1176 = vpop.f32.mrb[0].mxu0
        %v1177 = vadd.f32 %v884, %v1176
        %v1178 = vpop.f32.mrb[0].mxu0
        %v1179 = vpop.f32.mrb[0].mxu0
        %v1180 = vadd.f32 %v884, %v1179
        %v1181 = vpop.f32.mrb[0].mxu0
        %1182 = vmatprep.mubr.bf16.mxu0 0
        %1183 = vmatmul.mubr.bf16.gmra.mrb[0].mxu0 %v858
        %v1184 = vpop.f32.mrb[0].mxu0
        %v1185 = vadd.f32 %v884, %v1184
        %v1186 = vpop.f32.mrb[0].mxu0
        %v1187 = vpop.f32.mrb[0].mxu0
        %v1188 = vadd.f32 %v884, %v1187
        %v1189 = vpop.f32.mrb[0].mxu0
        %1190 = vmatprep.mubr.bf16.mxu0 0
        %1191 = vmatmul.mubr.bf16.gmra.mrb[0].mxu0 %v859
        %v1192 = vpop.f32.mrb[0].mxu0
        %v1193 = vadd.f32 %v884, %v1192
        %v1194 = vpop.f32.mrb[0].mxu0
        %v1195 = vpop.f32.mrb[0].mxu0
        %v1196 = vadd.f32 %v884, %v1195
        %v1197 = vpop.f32.mrb[0].mxu0
        %1198 = vmatprep.mubr.bf16.mxu0 0
        %1199 = vmatmul.mubr.bf16.gmra.mrb[0].mxu0 %v860
        %v1200 = vpop.f32.mrb[0].mxu0
        %v1201 = vadd.f32 %v884, %v1200
        %v1202 = vpop.f32.mrb[0].mxu0
        %v1203 = vpop.f32.mrb[0].mxu0
        %v1204 = vadd.f32 %v884, %v1203
        %v1205 = vpop.f32.mrb[0].mxu0
        %1206 = vmatprep.mubr.bf16.mxu0 0
        %1207 = vmatmul.mubr.bf16.gmra.mrb[0].mxu0 %v861
        %v1208 = vpop.f32.mrb[0].mxu0
        %v1209 = vadd.f32 %v884, %v1208
        %v1210 = vpop.f32.mrb[0].mxu0
        %v1211 = vpop.f32.mrb[0].mxu0
        %v1212 = vadd.f32 %v884, %v1211
        %v1213 = vpop.f32.mrb[0].mxu0
        %1214 = vmatprep.mubr.bf16.mxu0 0
        %1215 = vmatmul.mubr.bf16.gmra.mrb[0].mxu0 %v862
        %v1216 = vpop.f32.mrb[0].mxu0
        %v1217 = vadd.f32 %v884, %v1216
        %v1218 = vpop.f32.mrb[0].mxu0
        %v1219 = vpop.f32.mrb[0].mxu0
        %v1220 = vpop.f32.mrb[0].mxu0
        %1221 = vdwg.mxu0
        %v1222 = vmax.f32 %v969, 0.0
        %v1223 = vmax.f32 %v972, 0.0
        %v1224 = vmax.f32 %v977, 0.0
        %v1225 = vmax.f32 %v980, 0.0
        %v1226 = vmax.f32 %v985, 0.0
        %v1227 = vmax.f32 %v988, 0.0
        %v1228 = vmax.f32 %v993, 0.0
        %v1229 = vmax.f32 %v996, 0.0
        %v1230 = vmax.f32 %v1001, 0.0
        %v1231 = vmax.f32 %v1004, 0.0
        %v1232 = vmax.f32 %v1009, 0.0
        %v1233 = vmax.f32 %v1012, 0.0
        %v1234 = vmax.f32 %v1017, 0.0
        %v1235 = vmax.f32 %v1020, 0.0
        %v1236 = vmax.f32 %v1025, 0.0
        %v1237 = vmax.f32 %v1028, 0.0
        %v1238 = vmax.f32 %v1033, 0.0
        %v1239 = vmax.f32 %v1036, 0.0
        %v1240 = vmax.f32 %v1041, 0.0
        %v1241 = vmax.f32 %v1044, 0.0
        %v1242 = vmax.f32 %v1049, 0.0
        %v1243 = vmax.f32 %v1052, 0.0
        %v1244 = vmax.f32 %v1057, 0.0
        %v1245 = vmax.f32 %v1060, 0.0
        %v1246 = vmax.f32 %v1065, 0.0
        %v1247 = vmax.f32 %v1068, 0.0
        %v1248 = vmax.f32 %v1073, 0.0
        %v1249 = vmax.f32 %v1076, 0.0
        %v1250 = vmax.f32 %v1081, 0.0
        %v1251 = vmax.f32 %v1084, 0.0
        %v1252 = vmax.f32 %v1089, 0.0
        %v1253 = vmax.f32 %v1092, 0.0
        %v1254 = vmax.f32 %v1097, 0.0
        %v1255 = vmax.f32 %v1100, 0.0
        %v1256 = vmax.f32 %v1105, 0.0
        %v1257 = vmax.f32 %v1108, 0.0
        %v1258 = vmax.f32 %v1113, 0.0
        %v1259 = vmax.f32 %v1116, 0.0
        %v1260 = vmax.f32 %v1121, 0.0
        %v1261 = vmax.f32 %v1124, 0.0
        %v1262 = vmax.f32 %v1129, 0.0
        %v1263 = vmax.f32 %v1132, 0.0
        %v1264 = vmax.f32 %v1137, 0.0
        %v1265 = vmax.f32 %v1140, 0.0
        %v1266 = vmax.f32 %v1145, 0.0
        %v1267 = vmax.f32 %v1148, 0.0
        %v1268 = vmax.f32 %v1153, 0.0
        %v1269 = vmax.f32 %v1156, 0.0
        %v1270 = vmax.f32 %v1161, 0.0
        %v1271 = vmax.f32 %v1164, 0.0
        %v1272 = vmax.f32 %v1169, 0.0
        %v1273 = vmax.f32 %v1172, 0.0
        %v1274 = vmax.f32 %v1177, 0.0
        %v1275 = vmax.f32 %v1180, 0.0
        %v1276 = vmax.f32 %v1185, 0.0
        %v1277 = vmax.f32 %v1188, 0.0
        %v1278 = vmax.f32 %v1193, 0.0
        %v1279 = vmax.f32 %v1196, 0.0
        %v1280 = vmax.f32 %v1201, 0.0
        %v1281 = vmax.f32 %v1204, 0.0
        %v1282 = vmax.f32 %v1209, 0.0
        %v1283 = vmax.f32 %v1212, 0.0
        %v1284 = vmax.f32 %v1217, 0.0
        %v1285 = vpack.c.bf16 %v1223, %v1222
        %v1286 = vpack.c.bf16 %v1225, %v1224
        %v1287 = vpack.c.bf16 %v1227, %v1226
        %v1288 = vpack.c.bf16 %v1229, %v1228
        %v1289 = vpack.c.bf16 %v1231, %v1230
        %v1290 = vpack.c.bf16 %v1233, %v1232
        %v1291 = vpack.c.bf16 %v1235, %v1234
        %v1292 = vpack.c.bf16 %v1237, %v1236
        %v1293 = vpack.c.bf16 %v1239, %v1238
        %v1294 = vpack.c.bf16 %v1241, %v1240
        %v1295 = vpack.c.bf16 %v1243, %v1242
        %v1296 = vpack.c.bf16 %v1245, %v1244
        %v1297 = vpack.c.bf16 %v1247, %v1246
        %v1298 = vpack.c.bf16 %v1249, %v1248
        %v1299 = vpack.c.bf16 %v1251, %v1250
        %v1300 = vpack.c.bf16 %v1253, %v1252
        %v1301 = vpack.c.bf16 %v1255, %v1254
        %v1302 = vpack.c.bf16 %v1257, %v1256
        %v1303 = vpack.c.bf16 %v1259, %v1258
        %v1304 = vpack.c.bf16 %v1261, %v1260
        %v1305 = vpack.c.bf16 %v1263, %v1262
        %v1306 = vpack.c.bf16 %v1265, %v1264
        %v1307 = vpack.c.bf16 %v1267, %v1266
        %v1308 = vpack.c.bf16 %v1269, %v1268
        %v1309 = vpack.c.bf16 %v1271, %v1270
        %v1310 = vpack.c.bf16 %v1273, %v1272
        %v1311 = vpack.c.bf16 %v1275, %v1274
        %v1312 = vpack.c.bf16 %v1277, %v1276
        %v1313 = vpack.c.bf16 %v1279, %v1278
        %v1314 = vpack.c.bf16 %v1281, %v1280
        %v1315 = vpack.c.bf16 %v1283, %v1282
        %v1316 = vpack.c.bf16 %v1284, %v1284
        %v1317 = vld [vmem:[%s5] sm:$0xf]
        %v1318 = vld [vmem:[%s5 + $0x4] sm:$0xf]
        %v1319 = vld [vmem:[%s5 + $0x8] sm:$0xf]
        %v1320 = vld [vmem:[%s5 + $0xc] sm:$0xf]
        %v1321 = vld [vmem:[%s5 + $0x10] sm:$0xf]
        %v1322 = vld [vmem:[%s5 + $0x14] sm:$0xf]
        %v1323 = vld [vmem:[%s5 + $0x18] sm:$0xf]
        %v1324 = vld [vmem:[%s5 + $0x1c] sm:$0xf]
        %v1325 = vld [vmem:[%s5 + $0x20] sm:$0xf]
        %v1326 = vld [vmem:[%s5 + $0x24] sm:$0xf]
        %v1327 = vld [vmem:[%s5 + $0x28] sm:$0xf]
        %v1328 = vld [vmem:[%s5 + $0x2c] sm:$0xf]
        %v1329 = vld [vmem:[%s5 + $0x30] sm:$0xf]
        %v1330 = vld [vmem:[%s5 + $0x34] sm:$0xf]
        %v1331 = vld [vmem:[%s5 + $0x38] sm:$0xf]
        %v1332 = vld [vmem:[%s5 + $0x3c] sm:$0xf]
        %v1333 = vld [vmem:[%s6] sm:$0x1]
        %v1335 = vlaneseq
        %v1336 = vshrl.u32 %v1335, 7
        %v1337 = vsub.s32 0, %v1336
        %v1338 = vrot.slane %v1333, %v1337
        %v1356 = vunpack.c.l.b16 %v1317
        %v1357 = vunpack.c.l.b16 %v1318
        %v1358 = vunpack.c.l.b16 %v1319
        %v1359 = vunpack.c.l.b16 %v1320
        %v1360 = vunpack.c.l.b16 %v1321
        %v1361 = vunpack.c.l.b16 %v1322
        %v1362 = vunpack.c.l.b16 %v1323
        %v1363 = vunpack.c.l.b16 %v1324
        %v1364 = vunpack.c.l.b16 %v1325
        %v1365 = vunpack.c.l.b16 %v1326
        %v1366 = vunpack.c.l.b16 %v1327
        %v1367 = vunpack.c.l.b16 %v1328
        %v1368 = vunpack.c.l.b16 %v1329
        %v1369 = vunpack.c.l.b16 %v1330
        %v1370 = vunpack.c.l.b16 %v1331
        %v1371 = vunpack.c.l.b16 %v1332
        %v1372 = vpack.c.b16 %v1357, %v1356
        %v1373 = vpack.c.b16 %v1359, %v1358
        %v1374 = vpack.c.b16 %v1361, %v1360
        %v1375 = vpack.c.b16 %v1363, %v1362
        %v1376 = vpack.c.b16 %v1365, %v1364
        %v1377 = vpack.c.b16 %v1367, %v1366
        %v1378 = vpack.c.b16 %v1369, %v1368
        %v1379 = vpack.c.b16 %v1371, %v1370
        %1388 = vmatprep.subr.bf16.mxu0 0
        %1389 = vmatpush1.bf16.msra.mxu0 %v1372
        %1390 = vmatprep.subr.bf16.mxu0 0
        %1391 = vmatpush1.bf16.msra.mxu0 %v1373
        %1392 = vmatprep.subr.bf16.mxu0 0
        %1393 = vmatpush1.bf16.msra.mxu0 %v1374
        %1394 = vmatprep.subr.bf16.mxu0 0
        %1395 = vmatpush1.bf16.msra.mxu0 %v1375
        %1396 = vmatprep.subr.bf16.mxu0 0
        %1397 = vmatpush1.bf16.msra.mxu0 %v1376
        %1398 = vmatprep.subr.bf16.mxu0 0
        %1399 = vmatpush1.bf16.msra.mxu0 %v1377
        %1400 = vmatprep.subr.bf16.mxu0 0
        %1401 = vmatpush1.bf16.msra.mxu0 %v1378
        %1402 = vmatprep.subr.bf16.mxu0 0
        %1403 = vmatpush1.bf16.msra.mxu0 %v1379
        %1404 = vmatprep.subr.bf16.mxu0 0
        %1405 = vmatpush1.bf16.msra.mxu0 0
        %1406 = vmatprep.subr.bf16.mxu0 0
        %1407 = vmatpush1.bf16.msra.mxu0 0
        %1408 = vmatprep.subr.bf16.mxu0 0
        %1409 = vmatpush1.bf16.msra.mxu0 0
        %1410 = vmatprep.subr.bf16.mxu0 0
        %1411 = vmatpush1.bf16.msra.mxu0 0
        %1412 = vmatprep.subr.bf16.mxu0 0
        %1413 = vmatpush1.bf16.msra.mxu0 0
        %1414 = vmatprep.subr.bf16.mxu0 0
        %1415 = vmatpush1.bf16.msra.mxu0 0
        %1416 = vmatprep.subr.bf16.mxu0 0
        %1417 = vmatpush1.bf16.msra.mxu0 0
        %1418 = vmatprep.subr.bf16.mxu0 0
        %1419 = vmatpush1.bf16.msra.mxu0 0
        %1420 = vmatprep.mubr.bf16.mxu0 0
        %1421 = vmatmul.mubr.bf16.gmra.mrb[0].mxu0 %v1285
        %v1422 = vpop.f32.mrb[0].mxu0
        %v1423 = vadd.f32 %v1338, %v1422
        %v1424 = vpop.f32.mrb[0].mxu0
        %v1425 = vpop.f32.mrb[0].mxu0
        %v1426 = vadd.f32 %v1338, %v1425
        %v1427 = vpop.f32.mrb[0].mxu0
        %1428 = vmatprep.mubr.bf16.mxu0 0
        %1429 = vmatmul.mubr.bf16.gmra.mrb[0].mxu0 %v1286
        %v1430 = vpop.f32.mrb[0].mxu0
        %v1431 = vadd.f32 %v1338, %v1430
        %v1432 = vpop.f32.mrb[0].mxu0
        %v1433 = vpop.f32.mrb[0].mxu0
        %v1434 = vadd.f32 %v1338, %v1433
        %v1435 = vpop.f32.mrb[0].mxu0
        %1436 = vmatprep.mubr.bf16.mxu0 0
        %1437 = vmatmul.mubr.bf16.gmra.mrb[0].mxu0 %v1287
        %v1438 = vpop.f32.mrb[0].mxu0
        %v1439 = vadd.f32 %v1338, %v1438
        %v1440 = vpop.f32.mrb[0].mxu0
        %v1441 = vpop.f32.mrb[0].mxu0
        %v1442 = vadd.f32 %v1338, %v1441
        %v1443 = vpop.f32.mrb[0].mxu0
        %1444 = vmatprep.mubr.bf16.mxu0 0
        %1445 = vmatmul.mubr.bf16.gmra.mrb[0].mxu0 %v1288
        %v1446 = vpop.f32.mrb[0].mxu0
        %v1447 = vadd.f32 %v1338, %v1446
        %v1448 = vpop.f32.mrb[0].mxu0
        %v1449 = vpop.f32.mrb[0].mxu0
        %v1450 = vadd.f32 %v1338, %v1449
        %v1451 = vpop.f32.mrb[0].mxu0
        %1452 = vmatprep.mubr.bf16.mxu0 0
        %1453 = vmatmul.mubr.bf16.gmra.mrb[0].mxu0 %v1289
        %v1454 = vpop.f32.mrb[0].mxu0
        %v1455 = vadd.f32 %v1338, %v1454
        %v1456 = vpop.f32.mrb[0].mxu0
        %v1457 = vpop.f32.mrb[0].mxu0
        %v1458 = vadd.f32 %v1338, %v1457
        %v1459 = vpop.f32.mrb[0].mxu0
        %1460 = vmatprep.mubr.bf16.mxu0 0
        %1461 = vmatmul.mubr.bf16.gmra.mrb[0].mxu0 %v1290
        %v1462 = vpop.f32.mrb[0].mxu0
        %v1463 = vadd.f32 %v1338, %v1462
        %v1464 = vpop.f32.mrb[0].mxu0
        %v1465 = vpop.f32.mrb[0].mxu0
        %v1466 = vadd.f32 %v1338, %v1465
        %v1467 = vpop.f32.mrb[0].mxu0
        %1468 = vmatprep.mubr.bf16.mxu0 0
        %1469 = vmatmul.mubr.bf16.gmra.mrb[0].mxu0 %v1291
        %v1470 = vpop.f32.mrb[0].mxu0
        %v1471 = vadd.f32 %v1338, %v1470
        %v1472 = vpop.f32.mrb[0].mxu0
        %v1473 = vpop.f32.mrb[0].mxu0
        %v1474 = vadd.f32 %v1338, %v1473
        %v1475 = vpop.f32.mrb[0].mxu0
        %1476 = vmatprep.mubr.bf16.mxu0 0
        %1477 = vmatmul.mubr.bf16.gmra.mrb[0].mxu0 %v1292
        %v1478 = vpop.f32.mrb[0].mxu0
        %v1479 = vadd.f32 %v1338, %v1478
        %v1480 = vpop.f32.mrb[0].mxu0
        %v1481 = vpop.f32.mrb[0].mxu0
        %v1482 = vadd.f32 %v1338, %v1481
        %v1483 = vpop.f32.mrb[0].mxu0
        %1484 = vmatprep.mubr.bf16.mxu0 0
        %1485 = vmatmul.mubr.bf16.gmra.mrb[0].mxu0 %v1293
        %v1486 = vpop.f32.mrb[0].mxu0
        %v1487 = vadd.f32 %v1338, %v1486
        %v1488 = vpop.f32.mrb[0].mxu0
        %v1489 = vpop.f32.mrb[0].mxu0
        %v1490 = vadd.f32 %v1338, %v1489
        %v1491 = vpop.f32.mrb[0].mxu0
        %1492 = vmatprep.mubr.bf16.mxu0 0
        %1493 = vmatmul.mubr.bf16.gmra.mrb[0].mxu0 %v1294
        %v1494 = vpop.f32.mrb[0].mxu0
        %v1495 = vadd.f32 %v1338, %v1494
        %v1496 = vpop.f32.mrb[0].mxu0
        %v1497 = vpop.f32.mrb[0].mxu0
        %v1498 = vadd.f32 %v1338, %v1497
        %v1499 = vpop.f32.mrb[0].mxu0
        %1500 = vmatprep.mubr.bf16.mxu0 0
        %1501 = vmatmul.mubr.bf16.gmra.mrb[0].mxu0 %v1295
        %v1502 = vpop.f32.mrb[0].mxu0
        %v1503 = vadd.f32 %v1338, %v1502
        %v1504 = vpop.f32.mrb[0].mxu0
        %v1505 = vpop.f32.mrb[0].mxu0
        %v1506 = vadd.f32 %v1338, %v1505
        %v1507 = vpop.f32.mrb[0].mxu0
        %1508 = vmatprep.mubr.bf16.mxu0 0
        %1509 = vmatmul.mubr.bf16.gmra.mrb[0].mxu0 %v1296
        %v1510 = vpop.f32.mrb[0].mxu0
        %v1511 = vadd.f32 %v1338, %v1510
        %v1512 = vpop.f32.mrb[0].mxu0
        %v1513 = vpop.f32.mrb[0].mxu0
        %v1514 = vadd.f32 %v1338, %v1513
        %v1515 = vpop.f32.mrb[0].mxu0
        %1516 = vmatprep.mubr.bf16.mxu0 0
        %1517 = vmatmul.mubr.bf16.gmra.mrb[0].mxu0 %v1297
        %v1518 = vpop.f32.mrb[0].mxu0
        %v1519 = vadd.f32 %v1338, %v1518
        %v1520 = vpop.f32.mrb[0].mxu0
        %v1521 = vpop.f32.mrb[0].mxu0
        %v1522 = vadd.f32 %v1338, %v1521
        %v1523 = vpop.f32.mrb[0].mxu0
        %1524 = vmatprep.mubr.bf16.mxu0 0
        %1525 = vmatmul.mubr.bf16.gmra.mrb[0].mxu0 %v1298
        %v1526 = vpop.f32.mrb[0].mxu0
        %v1527 = vadd.f32 %v1338, %v1526
        %v1528 = vpop.f32.mrb[0].mxu0
        %v1529 = vpop.f32.mrb[0].mxu0
        %v1530 = vadd.f32 %v1338, %v1529
        %v1531 = vpop.f32.mrb[0].mxu0
        %1532 = vmatprep.mubr.bf16.mxu0 0
        %1533 = vmatmul.mubr.bf16.gmra.mrb[0].mxu0 %v1299
        %v1534 = vpop.f32.mrb[0].mxu0
        %v1535 = vadd.f32 %v1338, %v1534
        %v1536 = vpop.f32.mrb[0].mxu0
        %v1537 = vpop.f32.mrb[0].mxu0
        %v1538 = vadd.f32 %v1338, %v1537
        %v1539 = vpop.f32.mrb[0].mxu0
        %1540 = vmatprep.mubr.bf16.mxu0 0
        %1541 = vmatmul.mubr.bf16.gmra.mrb[0].mxu0 %v1300
        %v1542 = vpop.f32.mrb[0].mxu0
        %v1543 = vadd.f32 %v1338, %v1542
        %v1544 = vpop.f32.mrb[0].mxu0
        %v1545 = vpop.f32.mrb[0].mxu0
        %v1546 = vadd.f32 %v1338, %v1545
        %v1547 = vpop.f32.mrb[0].mxu0
        %1548 = vmatprep.mubr.bf16.mxu0 0
        %1549 = vmatmul.mubr.bf16.gmra.mrb[0].mxu0 %v1301
        %v1550 = vpop.f32.mrb[0].mxu0
        %v1551 = vadd.f32 %v1338, %v1550
        %v1552 = vpop.f32.mrb[0].mxu0
        %v1553 = vpop.f32.mrb[0].mxu0
        %v1554 = vadd.f32 %v1338, %v1553
        %v1555 = vpop.f32.mrb[0].mxu0
        %1556 = vmatprep.mubr.bf16.mxu0 0
        %1557 = vmatmul.mubr.bf16.gmra.mrb[0].mxu0 %v1302
        %v1558 = vpop.f32.mrb[0].mxu0
        %v1559 = vadd.f32 %v1338, %v1558
        %v1560 = vpop.f32.mrb[0].mxu0
        %v1561 = vpop.f32.mrb[0].mxu0
        %v1562 = vadd.f32 %v1338, %v1561
        %v1563 = vpop.f32.mrb[0].mxu0
        %1564 = vmatprep.mubr.bf16.mxu0 0
        %1565 = vmatmul.mubr.bf16.gmra.mrb[0].mxu0 %v1303
        %v1566 = vpop.f32.mrb[0].mxu0
        %v1567 = vadd.f32 %v1338, %v1566
        %v1568 = vpop.f32.mrb[0].mxu0
        %v1569 = vpop.f32.mrb[0].mxu0
        %v1570 = vadd.f32 %v1338, %v1569
        %v1571 = vpop.f32.mrb[0].mxu0
        %1572 = vmatprep.mubr.bf16.mxu0 0
        %1573 = vmatmul.mubr.bf16.gmra.mrb[0].mxu0 %v1304
        %v1574 = vpop.f32.mrb[0].mxu0
        %v1575 = vadd.f32 %v1338, %v1574
        %v1576 = vpop.f32.mrb[0].mxu0
        %v1577 = vpop.f32.mrb[0].mxu0
        %v1578 = vadd.f32 %v1338, %v1577
        %v1579 = vpop.f32.mrb[0].mxu0
        %1580 = vmatprep.mubr.bf16.mxu0 0
        %1581 = vmatmul.mubr.bf16.gmra.mrb[0].mxu0 %v1305
        %v1582 = vpop.f32.mrb[0].mxu0
        %v1583 = vadd.f32 %v1338, %v1582
        %v1584 = vpop.f32.mrb[0].mxu0
        %v1585 = vpop.f32.mrb[0].mxu0
        %v1586 = vadd.f32 %v1338, %v1585
        %v1587 = vpop.f32.mrb[0].mxu0
        %1588 = vmatprep.mubr.bf16.mxu0 0
        %1589 = vmatmul.mubr.bf16.gmra.mrb[0].mxu0 %v1306
        %v1590 = vpop.f32.mrb[0].mxu0
        %v1591 = vadd.f32 %v1338, %v1590
        %v1592 = vpop.f32.mrb[0].mxu0
        %v1593 = vpop.f32.mrb[0].mxu0
        %v1594 = vadd.f32 %v1338, %v1593
        %v1595 = vpop.f32.mrb[0].mxu0
        %1596 = vmatprep.mubr.bf16.mxu0 0
        %1597 = vmatmul.mubr.bf16.gmra.mrb[0].mxu0 %v1307
        %v1598 = vpop.f32.mrb[0].mxu0
        %v1599 = vadd.f32 %v1338, %v1598
        %v1600 = vpop.f32.mrb[0].mxu0
        %v1601 = vpop.f32.mrb[0].mxu0
        %v1602 = vadd.f32 %v1338, %v1601
        %v1603 = vpop.f32.mrb[0].mxu0
        %1604 = vmatprep.mubr.bf16.mxu0 0
        %1605 = vmatmul.mubr.bf16.gmra.mrb[0].mxu0 %v1308
        %v1606 = vpop.f32.mrb[0].mxu0
        %v1607 = vadd.f32 %v1338, %v1606
        %v1608 = vpop.f32.mrb[0].mxu0
        %v1609 = vpop.f32.mrb[0].mxu0
        %v1610 = vadd.f32 %v1338, %v1609
        %v1611 = vpop.f32.mrb[0].mxu0
        %1612 = vmatprep.mubr.bf16.mxu0 0
        %1613 = vmatmul.mubr.bf16.gmra.mrb[0].mxu0 %v1309
        %v1614 = vpop.f32.mrb[0].mxu0
        %v1615 = vadd.f32 %v1338, %v1614
        %v1616 = vpop.f32.mrb[0].mxu0
        %v1617 = vpop.f32.mrb[0].mxu0
        %v1618 = vadd.f32 %v1338, %v1617
        %v1619 = vpop.f32.mrb[0].mxu0
        %1620 = vmatprep.mubr.bf16.mxu0 0
        %1621 = vmatmul.mubr.bf16.gmra.mrb[0].mxu0 %v1310
        %v1622 = vpop.f32.mrb[0].mxu0
        %v1623 = vadd.f32 %v1338, %v1622
        %v1624 = vpop.f32.mrb[0].mxu0
        %v1625 = vpop.f32.mrb[0].mxu0
        %v1626 = vadd.f32 %v1338, %v1625
        %v1627 = vpop.f32.mrb[0].mxu0
        %1628 = vmatprep.mubr.bf16.mxu0 0
        %1629 = vmatmul.mubr.bf16.gmra.mrb[0].mxu0 %v1311
        %v1630 = vpop.f32.mrb[0].mxu0
        %v1631 = vadd.f32 %v1338, %v1630
        %v1632 = vpop.f32.mrb[0].mxu0
        %v1633 = vpop.f32.mrb[0].mxu0
        %v1634 = vadd.f32 %v1338, %v1633
        %v1635 = vpop.f32.mrb[0].mxu0
        %1636 = vmatprep.mubr.bf16.mxu0 0
        %1637 = vmatmul.mubr.bf16.gmra.mrb[0].mxu0 %v1312
        %v1638 = vpop.f32.mrb[0].mxu0
        %v1639 = vadd.f32 %v1338, %v1638
        %v1640 = vpop.f32.mrb[0].mxu0
        %v1641 = vpop.f32.mrb[0].mxu0
        %v1642 = vadd.f32 %v1338, %v1641
        %v1643 = vpop.f32.mrb[0].mxu0
        %1644 = vmatprep.mubr.bf16.mxu0 0
        %1645 = vmatmul.mubr.bf16.gmra.mrb[0].mxu0 %v1313
        %v1646 = vpop.f32.mrb[0].mxu0
        %v1647 = vadd.f32 %v1338, %v1646
        %v1648 = vpop.f32.mrb[0].mxu0
        %v1649 = vpop.f32.mrb[0].mxu0
        %v1650 = vadd.f32 %v1338, %v1649
        %v1651 = vpop.f32.mrb[0].mxu0
        %1652 = vmatprep.mubr.bf16.mxu0 0
        %1653 = vmatmul.mubr.bf16.gmra.mrb[0].mxu0 %v1314
        %v1654 = vpop.f32.mrb[0].mxu0
        %v1655 = vadd.f32 %v1338, %v1654
        %v1656 = vpop.f32.mrb[0].mxu0
        %v1657 = vpop.f32.mrb[0].mxu0
        %v1658 = vadd.f32 %v1338, %v1657
        %v1659 = vpop.f32.mrb[0].mxu0
        %1660 = vmatprep.mubr.bf16.mxu0 0
        %1661 = vmatmul.mubr.bf16.gmra.mrb[0].mxu0 %v1315
        %v1662 = vpop.f32.mrb[0].mxu0
        %v1663 = vadd.f32 %v1338, %v1662
        %v1664 = vpop.f32.mrb[0].mxu0
        %v1665 = vpop.f32.mrb[0].mxu0
        %v1666 = vadd.f32 %v1338, %v1665
        %v1667 = vpop.f32.mrb[0].mxu0
        %1668 = vmatprep.mubr.bf16.mxu0 0
        %1669 = vmatmul.mubr.bf16.gmra.mrb[0].mxu0 %v1316
        %v1670 = vpop.f32.mrb[0].mxu0
        %v1671 = vadd.f32 %v1338, %v1670
        %v1672 = vpop.f32.mrb[0].mxu0
        %v1673 = vpop.f32.mrb[0].mxu0
        %v1674 = vpop.f32.mrb[0].mxu0
        %1675 = vdwg.mxu0
        %1676 = vst [vmem:[%s302] sm:$0xff] %v1423
        %1677 = vst [vmem:[%s302 + $0x8] sm:$0xff] %v1426
        %1678 = vst [vmem:[%s302 + $0x10] sm:$0xff] %v1431
        %1679 = vst [vmem:[%s302 + $0x18] sm:$0xff] %v1434
        %1680 = vst [vmem:[%s302 + $0x20] sm:$0xff] %v1439
        %1681 = vst [vmem:[%s302 + $0x28] sm:$0xff] %v1442
        %1682 = vst [vmem:[%s302 + $0x30] sm:$0xff] %v1447
        %1683 = vst [vmem:[%s302 + $0x38] sm:$0xff] %v1450
        %1684 = vst [vmem:[%s302 + $0x40] sm:$0xff] %v1455
        %1685 = vst [vmem:[%s302 + $0x48] sm:$0xff] %v1458
        %1686 = vst [vmem:[%s302 + $0x50] sm:$0xff] %v1463
        %1687 = vst [vmem:[%s302 + $0x58] sm:$0xff] %v1466
        %1688 = vst [vmem:[%s302 + $0x60] sm:$0xff] %v1471
        %1689 = vst [vmem:[%s302 + $0x68] sm:$0xff] %v1474
        %1690 = vst [vmem:[%s302 + $0x70] sm:$0xff] %v1479
        %1691 = vst [vmem:[%s302 + $0x78] sm:$0xff] %v1482
        %1692 = vst [vmem:[%s302 + $0x80] sm:$0xff] %v1487
        %1693 = vst [vmem:[%s302 + $0x88] sm:$0xff] %v1490
        %1694 = vst [vmem:[%s302 + $0x90] sm:$0xff] %v1495
        %1695 = vst [vmem:[%s302 + $0x98] sm:$0xff] %v1498
        %1696 = vst [vmem:[%s302 + $0xa0] sm:$0xff] %v1503
        %1697 = vst [vmem:[%s302 + $0xa8] sm:$0xff] %v1506
        %1698 = vst [vmem:[%s302 + $0xb0] sm:$0xff] %v1511
        %1699 = vst [vmem:[%s302 + $0xb8] sm:$0xff] %v1514
        %1700 = vst [vmem:[%s302 + $0xc0] sm:$0xff] %v1519
        %1701 = vst [vmem:[%s302 + $0xc8] sm:$0xff] %v1522
        %1702 = vst [vmem:[%s302 + $0xd0] sm:$0xff] %v1527
        %1703 = vst [vmem:[%s302 + $0xd8] sm:$0xff] %v1530
        %1704 = vst [vmem:[%s302 + $0xe0] sm:$0xff] %v1535
        %1705 = vst [vmem:[%s302 + $0xe8] sm:$0xff] %v1538
        %1706 = vst [vmem:[%s302 + $0xf0] sm:$0xff] %v1543
        %1707 = vst [vmem:[%s302 + $0xf8] sm:$0xff] %v1546
        %1708 = vst [vmem:[%s302 + $0x100] sm:$0xff] %v1551
        %1709 = vst [vmem:[%s302 + $0x108] sm:$0xff] %v1554
        %1710 = vst [vmem:[%s302 + $0x110] sm:$0xff] %v1559
        %1711 = vst [vmem:[%s302 + $0x118] sm:$0xff] %v1562
        %1712 = vst [vmem:[%s302 + $0x120] sm:$0xff] %v1567
        %1713 = vst [vmem:[%s302 + $0x128] sm:$0xff] %v1570
        %1714 = vst [vmem:[%s302 + $0x130] sm:$0xff] %v1575
        %1715 = vst [vmem:[%s302 + $0x138] sm:$0xff] %v1578
        %1716 = vst [vmem:[%s302 + $0x140] sm:$0xff] %v1583
        %1717 = vst [vmem:[%s302 + $0x148] sm:$0xff] %v1586
        %1718 = vst [vmem:[%s302 + $0x150] sm:$0xff] %v1591
        %1719 = vst [vmem:[%s302 + $0x158] sm:$0xff] %v1594
        %1720 = vst [vmem:[%s302 + $0x160] sm:$0xff] %v1599
        %1721 = vst [vmem:[%s302 + $0x168] sm:$0xff] %v1602
        %1722 = vst [vmem:[%s302 + $0x170] sm:$0xff] %v1607
        %1723 = vst [vmem:[%s302 + $0x178] sm:$0xff] %v1610
        %1724 = vst [vmem:[%s302 + $0x180] sm:$0xff] %v1615
        %1725 = vst [vmem:[%s302 + $0x188] sm:$0xff] %v1618
        %1726 = vst [vmem:[%s302 + $0x190] sm:$0xff] %v1623
        %1727 = vst [vmem:[%s302 + $0x198] sm:$0xff] %v1626
        %1728 = vst [vmem:[%s302 + $0x1a0] sm:$0xff] %v1631
        %1729 = vst [vmem:[%s302 + $0x1a8] sm:$0xff] %v1634
        %1730 = vst [vmem:[%s302 + $0x1b0] sm:$0xff] %v1639
        %1731 = vst [vmem:[%s302 + $0x1b8] sm:$0xff] %v1642
        %1732 = vst [vmem:[%s302 + $0x1c0] sm:$0xff] %v1647
        %1733 = vst [vmem:[%s302 + $0x1c8] sm:$0xff] %v1650
        %1734 = vst [vmem:[%s302 + $0x1d0] sm:$0xff] %v1655
        %1735 = vst [vmem:[%s302 + $0x1d8] sm:$0xff] %v1658
        %1736 = vst [vmem:[%s302 + $0x1e0] sm:$0xff] %v1663
        %1737 = vst [vmem:[%s302 + $0x1e8] sm:$0xff] %v1666
        %1738 = vst [vmem:[%s302 + $0x1f0] sm:$0xff] %v1671
        %s1739 = sand.u32 %s184, 1
        %s1740 = scalar_lea.sflag [#allocation4], %s1739
        %s1741 = sand.u32 %s184, 1
        %s1742 = smul.addr %s1741, 504
        %s1743 = scalar_lea.vmem [#allocation5], %s1742
        // Predicated region
        $region53: #{decode_mlp.1} parent=47 // pred_check
          %p1744 = pneg %p194
        $region54: #{decode_mlp.1} parent=47 // pred_check_branch
          %1746 = sbr.rel (%p1744) target = $region56
        $region55: #{decode_mlp.1} parent=47 // pred_region
          %s1747 = smul.u32 63, %s24
          %s1748 = ssub.s32 125, %s1747
          %p1749 = scmp.lt.s32.totalorder %s1748, 63
          %s1750 = scalar_select %p1749, %s1748, 63
          %s1751 = smul.u32 128, %s1750
          %s1753 = ssub.s32 8064, %s1751
          %1754 = vsyncadd %s1740, %s1753
          %p1755 = scmp.ne.s32.totalorder 0, %s1751
          %s1756 = smul.addr %s1747, 128
          %s1757 = scalar_lea.hbm %s7, %s1756
          %s1758 = smul.u32 8, %s1750
          %s1759 = sshll.u32 %s1743, 4
          %s1760 = int_to_ptr.vmem [resolvable:$true] %s1759
          %s1761 = sshll.u32 %s1758, 4
          %1765 = dma.vmem_to_hbm [thread:$0]  (%p1755), %s1760, %s1761, %s1757, %s1740, 128, 128, 8
        $region56: #{decode_mlp.1} parent=47 // pred_fallthru
          _
      $region48: #{decode_mlp.1} parent=5 // pred_fallthru
        _
      %p1766 = scmp.le.s32.totalorder 2, %s19
      // Predicated region
      $region57: #{decode_mlp.1} parent=5 // pred_check
        %p1767 = pneg %p1766
      $region58: #{decode_mlp.1} parent=5 // pred_check_branch
        %1769 = sbr.rel (%p1767) target = $region60
      $region59: #{decode_mlp.1} parent=5 // pred_region
        %s1770 = ssub.s32 %s19, 2
        // Predicated region
        $region61: #{decode_mlp.1} parent=59 // pred_check
          %p1771 = pneg %p200
        $region62: #{decode_mlp.1} parent=59 // pred_check_branch
          %1773 = sbr.rel (%p1771) target = $region64
        $region63: #{decode_mlp.1} parent=59 // pred_region
          %s1774 = sand.u32 %s185, 1
          %s1775 = scalar_lea.sflag [#allocation4], %s1774
          %s1776 = sand.u32 %s185, 1
          %s1777 = smul.addr %s1776, 504
          %s1778 = scalar_lea.vmem [#allocation5], %s1777
          %1779 = dma.done %s1775, 8064
        $region64: #{decode_mlp.1} parent=59 // pred_fallthru
          _
      $region60: #{decode_mlp.1} parent=5 // pred_fallthru
        _
    $region6: #{decode_mlp.1} parent=1 // loop_footer
      %s23 = sadd.s32 1, %s19
    $region7: #{decode_mlp.1} parent=1 // loop_footer_branch
      %18 = sbr.rel target = $region3
    $region8: #{decode_mlp.1} parent=1 // loop_exit
      _
    %1780 = vsyncpa [#allocation3], 1
    %s1781 = scalar_lea.sflag [#allocation3], 1
    %1782 = vsyncpa %s1781, 1
    %1783 = vsyncpa [#allocation4], 1
    %s1784 = scalar_lea.sflag [#allocation4], 1
    %1785 = vsyncpa %s1784, 1

</llo_original>
